<compile_context>
chip_gen: v5e
topology: v5e:2x2
jax: 0.10.0
libtpu: 0.0.40
codegen_flags: <defaults>
</compile_context>

<pallas_src>
import functools

import jax
import jax.numpy as jnp
from jax.experimental import pallas as pl
from jax.experimental.pallas import tpu as pltpu

_LANE = 128   # matmul N-dims / output channels padded to the lane width
_W0 = 8       # sublane-aligned column offset of the interior in staging bufs


def _round_up(x, m):
    return (x + m - 1) // m * m


# ------------------------------- kernel -------------------------------------


def _down_kernel(x_ref, w1_ref, s1_ref, b1_ref, w2_ref, s2_ref, b2_ref,
                 o_ref, p_pad, a_pad, *, TH, Ho, Wo, Wp, Cin, Cmid_p):
    # x_ref : (1, 2*Ho, Wo, 2*Cin) bf16  input, W pooling pair folded into
    #                                    channels (layout-preserving reshape)
    # w1_ref: (9*Cin,   Cmid_p)    bf16  conv1 weights, im2col layout
    # w2_ref: (9*Cmid_p, Cout_p)   bf16  conv2 weights, im2col layout
    # s*/b* : (1, C_p)             f32   folded BatchNorm scale / bias
    # o_ref : (1, TH*Wo, Cout_p)   f32   output row tile, flattened layout
    # p_pad : VMEM (Ho+4, Wp, Cin)    bf16  zero-bordered pooled image
    #                                       (whole batch image, built at t==0)
    # a_pad : VMEM (TH+2, Wp, Cmid_p) bf16  zero-bordered conv1 slab (per tile)
    t = pl.program_id(1)
    last = pl.num_programs(1) - 1
    r0 = pl.multiple_of(t * TH, TH)          # first output row of this tile

    # ---- once per batch: zero static borders + whole-image 2x2 max-pool ----
    @pl.when(t == 0)
    def _():
        zp = p_pad.dtype
        p_pad[0:2, :, :] = jnp.zeros((2, Wp, Cin), zp)
        p_pad[Ho + 2:Ho + 4, :, :] = jnp.zeros((2, Wp, Cin), zp)
        p_pad[:, 0:_W0, :] = jnp.zeros((Ho + 4, _W0, Cin), zp)
        p_pad[:, _W0 + Wo:Wp, :] = jnp.zeros((Ho + 4, Wp - _W0 - Wo, Cin), zp)
        za = a_pad.dtype
        a_pad[:, 0:_W0, :] = jnp.zeros((TH + 2, _W0, Cmid_p), za)
        a_pad[:, _W0 + Wo:Wp, :] = jnp.zeros((TH + 2, Wp - _W0 - Wo, Cmid_p), za)

        x = x_ref[0]                                      # (2*Ho, Wo, 2*Cin)
        xw = jnp.maximum(x[:, :, :Cin], x[:, :, Cin:])    # pool along W
        xw = xw.reshape(Ho, 2, Wo, Cin)                   # split leading dim
        pooled = jnp.maximum(xw[:, 0], xw[:, 1])          # pool along H
        p_pad[2:Ho + 2, _W0:_W0 + Wo, :] = pooled

    # ---- one im2col matmul per conv: K = 9*cin, N = C_p (lane-dense) -------
    def conv_bn_relu(src, rows, cin, w_ref, s_ref, b_ref):
        taps = [src[dy:dy + rows, _W0 - 1 + dx:_W0 - 1 + dx + Wo, :]
                for dy in range(3) for dx in range(3)]
        patches = jnp.concatenate(taps, axis=-1).reshape(rows * Wo, 9 * cin)
        y = jnp.dot(patches, w_ref[...], preferred_element_type=jnp.float32)
        y = y * s_ref[...] + b_ref[...]                   # folded BN (f32)
        return jnp.maximum(y, 0.0)                        # ReLU (f32)

    # conv1 over this tile's halo'd pooled window: TH+2 rows (1-row halo for
    # conv2).  p_pad row j holds pooled row j-2 (rows 0,1,Ho+2,Ho+3 are zero).
    xs = p_pad[pl.ds(r0, TH + 4), :, :]                   # (TH+4, Wp, Cin)
    y1 = conv_bn_relu(xs, TH + 2, Cin, w1_ref, s1_ref, b1_ref)
    a_pad[:, _W0:_W0 + Wo, :] = (
        y1.reshape(TH + 2, Wo, Cmid_p).astype(a_pad.dtype))

    # Slab rows that fall outside the image are conv2's zero padding; patch
    # them (cheaper than special-casing the matmul shapes at the boundaries).
    @pl.when(t == 0)
    def _():
        a_pad[0:1, _W0:_W0 + Wo, :] = jnp.zeros((1, Wo, Cmid_p), a_pad.dtype)

    @pl.when(t == last)
    def _():
        a_pad[TH + 1:TH + 2, _W0:_W0 + Wo, :] = jnp.zeros(
            (1, Wo, Cmid_p), a_pad.dtype)

    # conv2 over the staged slab -> this tile's TH output rows.
    y2 = conv_bn_relu(a_pad[...], TH, Cmid_p, w2_ref, s2_ref, b2_ref)
    o_ref[0] = y2.astype(o_ref.dtype)


# ------------------------------- wrapper -------------------------------------


def _choose_tile_h(Ho, Wo, Wp, Cin, Cmid_p, Cout_p,
                   budget_bytes=24 * 1024 * 1024, max_rows=256):
    """Largest row-tile height TH dividing Ho whose per-step VMEM estimate
    fits the budget (output sublane constraint: TH*Wo % 8 == 0 or TH == Ho)."""
    x_block = 2 * (2 * Ho) * Wo * (2 * Cin) * 2            # input block, 2 bufs
    weights = 2 * (9 * Cin * Cmid_p + 9 * Cmid_p * Cout_p) * 2  # conservative 2x
    scales = 2 * 2 * (Cmid_p + Cout_p) * 4

    def est(th):
        return (x_block + weights + scales
                + (Ho + 4) * Wp * Cin * 2                  # p_pad (bf16)
                + (th + 2) * Wp * Cmid_p * 2               # a_pad (bf16)
                + (th + 2) * Wo * 9 * Cin * 2              # conv1 im2col patches
                + th * Wo * 9 * Cmid_p * 2                 # conv2 im2col patches
                + (th + 2) * Wo * Cmid_p * 4               # conv1 f32 result
                + th * Wo * Cout_p * 4                     # conv2 f32 result
                + 2 * th * Wo * Cout_p * 4)                # output block, 2 bufs

    cands = [th for th in range(1, min(Ho, max_rows) + 1)
             if Ho % th == 0 and (th == Ho or (th * Wo) % 8 == 0)]
    if not cands:
        cands = [Ho]
    for th in sorted(cands, reverse=True):
        if est(th) <= budget_bytes:
            return th, est(th)
    th = min(cands)
    return th, est(th)


def _const_block_spec(shape):
    """BlockSpec for an operand whose block index never changes.  Request
    single buffering (perf feedback); fall back to the default double-buffered
    spec if this JAX build does not support pipeline_mode."""
    index_map = lambda n, t: (0,) * len(shape)
    try:
        return pl.BlockSpec(shape, index_map, pipeline_mode=pl.Buffered(1))
    except Exception:  # unsupported kwarg / buffer count on this JAX version
        return pl.BlockSpec(shape, index_map)


def down_fused(x_nhwc, w1, s1, b1, w2, s2, b2):
    """MaxPool2d(2) -> (conv3x3 + BN + ReLU) x 2, one pallas_call. NHWC f32."""
    N, H, W, Cin = x_nhwc.shape
    Ho, Wo = H // 2, W // 2
    Cmid, Cout = w1.shape[-1], w2.shape[-1]
    Cmid_p = _round_up(Cmid, _LANE)
    Cout_p = _round_up(Cout, _LANE)
    Wp = _W0 + _round_up(Wo + 1, 8)            # staging width, sublane-aligned

    # MaxPool2d(2) floors odd spatial dims (same as PyTorch); fold the W 2x2
    # pair into channels (free reshape) and cast to bf16 for the MXU.
    x_folded = (x_nhwc[:, :2 * Ho, :2 * Wo, :]
                .reshape(N, 2 * Ho, Wo, 2 * Cin).astype(jnp.bfloat16))

    # im2col weight layout, zero-padded to lane-dense output channels.
    w1r = jnp.pad(w1.reshape(9 * Cin, Cmid),
                  ((0, 0), (0, Cmid_p - Cmid))).astype(jnp.bfloat16)
    w2r = jnp.pad(w2, ((0, 0), (0, 0), (0, Cmid_p - Cmid), (0, Cout_p - Cout))
                  ).reshape(9 * Cmid_p, Cout_p).astype(jnp.bfloat16)
    s1p = jnp.pad(s1, (0, Cmid_p - Cmid)).reshape(1, Cmid_p).astype(jnp.float32)
    b1p = jnp.pad(b1, (0, Cmid_p - Cmid)).reshape(1, Cmid_p).astype(jnp.float32)
    s2p = jnp.pad(s2, (0, Cout_p - Cout)).reshape(1, Cout_p).astype(jnp.float32)
    b2p = jnp.pad(b2, (0, Cout_p - Cout)).reshape(1, Cout_p).astype(jnp.float32)

    TH, est_bytes = _choose_tile_h(Ho, Wo, Wp, Cin, Cmid_p, Cout_p)
    n_tiles = Ho // TH
    vmem_limit = int(min(max(2 * est_bytes, 32 * 1024 * 1024),
                         56 * 1024 * 1024))

    kernel = functools.partial(_down_kernel, TH=TH, Ho=Ho, Wo=Wo, Wp=Wp,
                               Cin=Cin, Cmid_p=Cmid_p)

    out = pl.pallas_call(
        kernel,
        out_shape=jax.ShapeDtypeStruct((N, Ho * Wo, Cout_p), jnp.float32),
        grid=(N, n_tiles),
        in_specs=[
            # Whole (folded) image per batch; its block index is constant
            # along the row-tile axis, so it is DMA'd once per batch and
            # stays resident in VMEM across that batch's row tiles.
            pl.BlockSpec((1, 2 * Ho, Wo, 2 * Cin), lambda n, t: (n, 0, 0, 0)),
            _const_block_spec((9 * Cin, Cmid_p)),            # w1 (single-buf)
            pl.BlockSpec((1, Cmid_p), lambda n, t: (0, 0)),  # s1
            pl.BlockSpec((1, Cmid_p), lambda n, t: (0, 0)),  # b1
            _const_block_spec((9 * Cmid_p, Cout_p)),         # w2 (single-buf)
            pl.BlockSpec((1, Cout_p), lambda n, t: (0, 0)),  # s2
            pl.BlockSpec((1, Cout_p), lambda n, t: (0, 0)),  # b2
        ],
        out_specs=pl.BlockSpec((1, TH * Wo, Cout_p), lambda n, t: (n, t, 0)),
        scratch_shapes=[
            pltpu.VMEM((Ho + 4, Wp, Cin), jnp.bfloat16),     # pooled image
            pltpu.VMEM((TH + 2, Wp, Cmid_p), jnp.bfloat16),  # conv1 slab
        ],
        compiler_params=pltpu.CompilerParams(
            # Row-tile axis must stay "arbitrary": the pooled image is staged
            # once per batch at t == 0 and reused by the later tiles.
            dimension_semantics=("parallel", "arbitrary"),
            vmem_limit_bytes=vmem_limit),
    )(x_folded, w1r, s1p, b1p, w2r, s2p, b2p)

    return out.reshape(N, Ho, Wo, Cout_p)[..., :Cout]


# --------------------------- params & forward --------------------------------


def _fold_bn(conv_bias, gamma, beta, mean, var, eps=1e-5):
    scale = gamma * jax.lax.rsqrt(var + eps)
    bias = (conv_bias - mean) * scale + beta
    return scale, bias


def init_down_params(key, in_channels, out_channels):
    mid = out_channels  # DoubleConv: mid_channels defaults to out_channels
    ks = jax.random.split(key, 12)

    def conv_w(k, cin, cout):
        return 0.1 * jax.random.normal(k, (3, 3, cin, cout), jnp.float32)

    return {
        "w1": conv_w(ks[0], in_channels, mid),
        "b1": 0.1 * jax.random.normal(ks[1], (mid,), jnp.float32),
        "gamma1": 1.0 + 0.1 * jax.random.normal(ks[2], (mid,), jnp.float32),
        "beta1": 0.1 * jax.random.normal(ks[3], (mid,), jnp.float32),
        "mean1": 0.05 * jax.random.normal(ks[4], (mid,), jnp.float32),
        "var1": 1.0 + 0.1 * jnp.abs(jax.random.normal(ks[5], (mid,), jnp.float32)),
        "w2": conv_w(ks[6], mid, out_channels),
        "b2": 0.1 * jax.random.normal(ks[7], (out_channels,), jnp.float32),
        "gamma2": 1.0 + 0.1 * jax.random.normal(ks[8], (out_channels,), jnp.float32),
        "beta2": 0.1 * jax.random.normal(ks[9], (out_channels,), jnp.float32),
        "mean2": 0.05 * jax.random.normal(ks[10], (out_channels,), jnp.float32),
        "var2": 1.0 + 0.1 * jnp.abs(jax.random.normal(ks[11], (out_channels,), jnp.float32)),
    }


def down_forward(params, x_nchw):
    # NCHW -> NHWC (single XLA pass at the module boundary).
    x = jnp.transpose(x_nchw, (0, 2, 3, 1))
    s1, b1 = _fold_bn(params["b1"], params["gamma1"], params["beta1"],
                      params["mean1"], params["var1"])
    s2, b2 = _fold_bn(params["b2"], params["gamma2"], params["beta2"],
                      params["mean2"], params["var2"])
    y = down_fused(x, params["w1"], s1, b1, params["w2"], s2, b2)
    # NHWC -> NCHW to match the PyTorch output convention.
    return jnp.transpose(y, (0, 3, 1, 2))


# ------------------------------ references -----------------------------------


def _make_reference(bf16_matmuls):
    """Pure-JAX reference; bf16_matmuls=True mirrors the kernel's bf16-in /
    f32-accumulate datapath for a tight numerical check."""

    def ref(params, x_nchw):
        x = jnp.transpose(x_nchw, (0, 2, 3, 1))  # NHWC
        x = jax.lax.reduce_window(x, -jnp.inf, jax.lax.max,
                                  (1, 2, 2, 1), (1, 2, 2, 1), "VALID")

        def conv(x, w, scale, bias):
            if bf16_matmuls:
                x = x.astype(jnp.bfloat16)
                w = w.astype(jnp.bfloat16)
            y = jax.lax.conv_general_dilated(
                x, w, window_strides=(1, 1), padding=((1, 1), (1, 1)),
                dimension_numbers=("NHWC", "HWIO", "NHWC"),
                preferred_element_type=jnp.float32)
            y = y * scale + bias
            return jnp.maximum(y, 0.0)

        s1, b1 = _fold_bn(params["b1"], params["gamma1"], params["beta1"],
                          params["mean1"], params["var1"])
        x = conv(x, params["w1"], s1, b1)
        s2, b2 = _fold_bn(params["b2"], params["gamma2"], params["beta2"],
                          params["mean2"], params["var2"])
        x = conv(x, params["w2"], s2, b2)
        return jnp.transpose(x, (0, 3, 1, 2))

    return ref


# -------------------------------- main ---------------------------------------

if __name__ == "__main__":
    in_channels, out_channels = 4, 8
    key = jax.random.PRNGKey(0)
    k_params, k_x = jax.random.split(key)

    params = init_down_params(k_params, in_channels, out_channels)
    x = jax.random.normal(k_x, (2, in_channels, 16, 16), jnp.float32)  # NCHW

    out = jax.block_until_ready(down_forward(params, x))
    assert out.shape == (2, out_channels, 8, 8), out.shape

    # Tight check vs a reference that mirrors the kernel's bf16 matmul inputs.
    ref16 = jax.block_until_ready(_make_reference(True)(params, x))
    assert jnp.allclose(out, ref16, rtol=5e-3, atol=5e-3), float(
        jnp.max(jnp.abs(out - ref16)))

    # Loose check vs the exact f32 module math (bf16 rounding is expected).
    ref32 = jax.block_until_ready(_make_reference(False)(params, x))
    assert jnp.allclose(out, ref32, rtol=5e-2, atol=5e-2), float(
        jnp.max(jnp.abs(out - ref32)))

    print("KERNEL_OK")
</pallas_src>

<mosaic_0001>
module attributes {stable_mosaic.version = 11 : i64} {
  func.func @_down_kernel(%arg0: i32, %arg1: i32, %arg2: memref<1x16x8x8xbf16, #tpu.memory_space<vmem>>, %arg3: memref<36x128xbf16, #tpu.memory_space<vmem>>, %arg4: memref<1x128xf32, #tpu.memory_space<vmem>>, %arg5: memref<1x128xf32, #tpu.memory_space<vmem>>, %arg6: memref<1152x128xbf16, #tpu.memory_space<vmem>>, %arg7: memref<1x128xf32, #tpu.memory_space<vmem>>, %arg8: memref<1x128xf32, #tpu.memory_space<vmem>>, %arg9: memref<1x64x128xf32, #tpu.memory_space<vmem>>, %arg10: memref<12x24x4xbf16, #tpu.memory_space<vmem>>, %arg11: memref<10x24x128xbf16, #tpu.memory_space<vmem>>) attributes {dimension_semantics = [#tpu.dimension_semantics<parallel>, #tpu.dimension_semantics<arbitrary>], iteration_bounds = array<i64: 2, 1>, scalar_prefetch = 0 : i64, scratch_operands = 2 : i64, tpu.core_type = #tpu.core_type<tc>, window_params = [{transform_indices = @transform_0, window_bounds = array<i64: 1, 16, 8, 8>}, {pipeline_mode = #tpu.pipeline_mode<synchronous>, transform_indices = @transform_1, window_bounds = array<i64: 36, 128>}, {pipeline_mode = #tpu.pipeline_mode<synchronous>, transform_indices = @transform_2, window_bounds = array<i64: 1, 128>}, {pipeline_mode = #tpu.pipeline_mode<synchronous>, transform_indices = @transform_3, window_bounds = array<i64: 1, 128>}, {pipeline_mode = #tpu.pipeline_mode<synchronous>, transform_indices = @transform_4, window_bounds = array<i64: 1152, 128>}, {pipeline_mode = #tpu.pipeline_mode<synchronous>, transform_indices = @transform_5, window_bounds = array<i64: 1, 128>}, {pipeline_mode = #tpu.pipeline_mode<synchronous>, transform_indices = @transform_6, window_bounds = array<i64: 1, 128>}, {transform_indices = @transform_7, window_bounds = array<i64: 1, 64, 128>}]} {
    %c8_i32 = arith.constant 8 : i32
    %0 = arith.muli %arg1, %c8_i32 : i32
    %1 = tpu.assume_multiple %0, 8 : i32
    %c0_i32 = arith.constant 0 : i32
    %2 = arith.cmpi eq, %arg1, %c0_i32 : i32
    %3 = arith.extui %2 : i1 to i32
    %c0_i32_0 = arith.constant 0 : i32
    %4 = arith.cmpi ne, %3, %c0_i32_0 : i32
    scf.if %4 {
      %cst_29 = arith.constant 0.000000e+00 : bf16
      %62 = vector.broadcast %cst_29 : bf16 to vector<2x24x4xbf16>
      %c0_30 = arith.constant 0 : index
      %c0_31 = arith.constant 0 : index
      %c0_32 = arith.constant 0 : index
      %63 = vector.load %arg10[%c0_30, %c0_31, %c0_32] : memref<12x24x4xbf16, #tpu.memory_space<vmem>>, vector<2x24x4xbf16>
      tpu.vector_store %arg10[%c0_30, %c0_31, %c0_32], %62 {strides = array<i32>} : memref<12x24x4xbf16, #tpu.memory_space<vmem>>, vector<2x24x4xbf16>,
      %cst_33 = arith.constant 0.000000e+00 : bf16
      %64 = vector.broadcast %cst_33 : bf16 to vector<2x24x4xbf16>
      %c10 = arith.constant 10 : index
      %c0_34 = arith.constant 0 : index
      %c0_35 = arith.constant 0 : index
      %65 = vector.load %arg10[%c10, %c0_34, %c0_35] : memref<12x24x4xbf16, #tpu.memory_space<vmem>>, vector<2x24x4xbf16>
      tpu.vector_store %arg10[%c10, %c0_34, %c0_35], %64 {strides = array<i32>} : memref<12x24x4xbf16, #tpu.memory_space<vmem>>, vector<2x24x4xbf16>,
      %cst_36 = arith.constant 0.000000e+00 : bf16
      %66 = vector.broadcast %cst_36 : bf16 to vector<12x8x4xbf16>
      %c0_37 = arith.constant 0 : index
      %c0_38 = arith.constant 0 : index
      %c0_39 = arith.constant 0 : index
      %67 = vector.load %arg10[%c0_37, %c0_38, %c0_39] : memref<12x24x4xbf16, #tpu.memory_space<vmem>>, vector<12x8x4xbf16>
      tpu.vector_store %arg10[%c0_37, %c0_38, %c0_39], %66 {strides = array<i32>} : memref<12x24x4xbf16, #tpu.memory_space<vmem>>, vector<12x8x4xbf16>,
      %cst_40 = arith.constant 0.000000e+00 : bf16
      %68 = vector.broadcast %cst_40 : bf16 to vector<12x8x4xbf16>
      %c0_41 = arith.constant 0 : index
      %c16 = arith.constant 16 : index
      %c0_42 = arith.constant 0 : index
      %69 = vector.load %arg10[%c0_41, %c16, %c0_42] : memref<12x24x4xbf16, #tpu.memory_space<vmem>>, vector<12x8x4xbf16>
      tpu.vector_store %arg10[%c0_41, %c16, %c0_42], %68 {strides = array<i32>} : memref<12x24x4xbf16, #tpu.memory_space<vmem>>, vector<12x8x4xbf16>,
      %cst_43 = arith.constant 0.000000e+00 : bf16
      %70 = vector.broadcast %cst_43 : bf16 to vector<10x8x128xbf16>
      %c0_44 = arith.constant 0 : index
      %c0_45 = arith.constant 0 : index
      %c0_46 = arith.constant 0 : index
      %71 = vector.load %arg11[%c0_44, %c0_45, %c0_46] : memref<10x24x128xbf16, #tpu.memory_space<vmem>>, vector<10x8x128xbf16>
      tpu.vector_store %arg11[%c0_44, %c0_45, %c0_46], %70 {strides = array<i32>} : memref<10x24x128xbf16, #tpu.memory_space<vmem>>, vector<10x8x128xbf16>,
      %cst_47 = arith.constant 0.000000e+00 : bf16
      %72 = vector.broadcast %cst_47 : bf16 to vector<10x8x128xbf16>
      %c0_48 = arith.constant 0 : index
      %c16_49 = arith.constant 16 : index
      %c0_50 = arith.constant 0 : index
      %73 = vector.load %arg11[%c0_48, %c16_49, %c0_50] : memref<10x24x128xbf16, #tpu.memory_space<vmem>>, vector<10x8x128xbf16>
      tpu.vector_store %arg11[%c0_48, %c16_49, %c0_50], %72 {strides = array<i32>} : memref<10x24x128xbf16, #tpu.memory_space<vmem>>, vector<10x8x128xbf16>,
      %c0_51 = arith.constant 0 : index
      %c0_52 = arith.constant 0 : index
      %c0_53 = arith.constant 0 : index
      %c0_54 = arith.constant 0 : index
      %74 = vector.load %arg2[%c0_51, %c0_52, %c0_53, %c0_54] : memref<1x16x8x8xbf16, #tpu.memory_space<vmem>>, vector<1x16x8x8xbf16>
      %75 = vector.shape_cast %74 : vector<1x16x8x8xbf16> to vector<16x8x8xbf16>
      %76 = vector.extract_strided_slice %75 {offsets = [0, 0, 0], sizes = [16, 8, 4], strides = [1, 1, 1]} : vector<16x8x8xbf16> to vector<16x8x4xbf16>
      %77 = vector.extract_strided_slice %75 {offsets = [0, 0, 4], sizes = [16, 8, 4], strides = [1, 1, 1]} : vector<16x8x8xbf16> to vector<16x8x4xbf16>
      %78 = arith.maximumf %76, %77 : vector<16x8x4xbf16>
      %79 = vector.shape_cast %78 : vector<16x8x4xbf16> to vector<8x2x8x4xbf16>
      %80 = vector.extract_strided_slice %79 {offsets = [0, 0, 0, 0], sizes = [8, 1, 8, 4], strides = [1, 1, 1, 1]} : vector<8x2x8x4xbf16> to vector<8x1x8x4xbf16>
      %81 = vector.shape_cast %80 : vector<8x1x8x4xbf16> to vector<8x8x4xbf16>
      %82 = vector.extract_strided_slice %79 {offsets = [0, 1, 0, 0], sizes = [8, 1, 8, 4], strides = [1, 1, 1, 1]} : vector<8x2x8x4xbf16> to vector<8x1x8x4xbf16>
      %83 = vector.shape_cast %82 : vector<8x1x8x4xbf16> to vector<8x8x4xbf16>
      %84 = arith.maximumf %81, %83 : vector<8x8x4xbf16>
      %c2 = arith.constant 2 : index
      %c8_55 = arith.constant 8 : index
      %c0_56 = arith.constant 0 : index
      %85 = vector.load %arg10[%c2, %c8_55, %c0_56] : memref<12x24x4xbf16, #tpu.memory_space<vmem>>, vector<8x8x4xbf16>
      tpu.vector_store %arg10[%c2, %c8_55, %c0_56], %84 {strides = array<i32>} : memref<12x24x4xbf16, #tpu.memory_space<vmem>>, vector<8x8x4xbf16>,
    } else {
    }
    %5 = arith.index_cast %1 : i32 to index
    %c0 = arith.constant 0 : index
    %c0_1 = arith.constant 0 : index
    %6 = vector.load %arg10[%5, %c0, %c0_1] : memref<12x24x4xbf16, #tpu.memory_space<vmem>>, vector<12x24x4xbf16>
    %7 = vector.extract_strided_slice %6 {offsets = [0, 7, 0], sizes = [10, 8, 4], strides = [1, 1, 1]} : vector<12x24x4xbf16> to vector<10x8x4xbf16>
    %8 = vector.extract_strided_slice %6 {offsets = [0, 8, 0], sizes = [10, 8, 4], strides = [1, 1, 1]} : vector<12x24x4xbf16> to vector<10x8x4xbf16>
    %9 = vector.extract_strided_slice %6 {offsets = [0, 9, 0], sizes = [10, 8, 4], strides = [1, 1, 1]} : vector<12x24x4xbf16> to vector<10x8x4xbf16>
    %10 = vector.extract_strided_slice %6 {offsets = [1, 7, 0], sizes = [10, 8, 4], strides = [1, 1, 1]} : vector<12x24x4xbf16> to vector<10x8x4xbf16>
    %11 = vector.extract_strided_slice %6 {offsets = [1, 8, 0], sizes = [10, 8, 4], strides = [1, 1, 1]} : vector<12x24x4xbf16> to vector<10x8x4xbf16>
    %12 = vector.extract_strided_slice %6 {offsets = [1, 9, 0], sizes = [10, 8, 4], strides = [1, 1, 1]} : vector<12x24x4xbf16> to vector<10x8x4xbf16>
    %13 = vector.extract_strided_slice %6 {offsets = [2, 7, 0], sizes = [10, 8, 4], strides = [1, 1, 1]} : vector<12x24x4xbf16> to vector<10x8x4xbf16>
    %14 = vector.extract_strided_slice %6 {offsets = [2, 8, 0], sizes = [10, 8, 4], strides = [1, 1, 1]} : vector<12x24x4xbf16> to vector<10x8x4xbf16>
    %15 = vector.extract_strided_slice %6 {offsets = [2, 9, 0], sizes = [10, 8, 4], strides = [1, 1, 1]} : vector<12x24x4xbf16> to vector<10x8x4xbf16>
    %16 = tpu.concatenate %7, %8, %9, %10, %11, %12, %13, %14, %15 in 2 : vector<10x8x4xbf16>, vector<10x8x4xbf16>, vector<10x8x4xbf16>, vector<10x8x4xbf16>, vector<10x8x4xbf16>, vector<10x8x4xbf16>, vector<10x8x4xbf16>, vector<10x8x4xbf16>, vector<10x8x4xbf16> -> vector<10x8x36xbf16>
    %17 = vector.shape_cast %16 : vector<10x8x36xbf16> to vector<80x36xbf16>
    %c0_2 = arith.constant 0 : index
    %c0_3 = arith.constant 0 : index
    %18 = vector.load %arg3[%c0_2, %c0_3] : memref<36x128xbf16, #tpu.memory_space<vmem>>, vector<36x128xbf16>
    %cst = arith.constant dense<0.000000e+00> : vector<80x128xf32>
    %19 = tpu.matmul %17, %18, %cst {dimension_numbers = #tpu.dot_dimension_numbers<[1], [0], [0], [1], [0, 0, 1, 1], [], []>} : vector<80x36xbf16>, vector<36x128xbf16>, vector<80x128xf32> -> vector<80x128xf32>
    %c0_4 = arith.constant 0 : index
    %c0_5 = arith.constant 0 : index
    %20 = vector.load %arg4[%c0_4, %c0_5] : memref<1x128xf32, #tpu.memory_space<vmem>>, vector<1x128xf32>
    %21 = vector.broadcast %20 : vector<1x128xf32> to vector<80x128xf32>
    %22 = arith.mulf %19, %21 : vector<80x128xf32>
    %c0_6 = arith.constant 0 : index
    %c0_7 = arith.constant 0 : index
    %23 = vector.load %arg5[%c0_6, %c0_7] : memref<1x128xf32, #tpu.memory_space<vmem>>, vector<1x128xf32>
    %24 = vector.broadcast %23 : vector<1x128xf32> to vector<80x128xf32>
    %25 = arith.addf %22, %24 : vector<80x128xf32>
    %cst_8 = arith.constant 0.000000e+00 : f32
    %26 = vector.broadcast %cst_8 : f32 to vector<80x128xf32>
    %27 = arith.maximumf %25, %26 : vector<80x128xf32>
    %28 = vector.shape_cast %27 : vector<80x128xf32> to vector<10x8x128xf32>
    %29 = arith.truncf %28 : vector<10x8x128xf32> to vector<10x8x128xbf16>
    %c0_9 = arith.constant 0 : index
    %c8 = arith.constant 8 : index
    %c0_10 = arith.constant 0 : index
    %30 = vector.load %arg11[%c0_9, %c8, %c0_10] : memref<10x24x128xbf16, #tpu.memory_space<vmem>>, vector<10x8x128xbf16>
    tpu.vector_store %arg11[%c0_9, %c8, %c0_10], %29 {strides = array<i32>} : memref<10x24x128xbf16, #tpu.memory_space<vmem>>, vector<10x8x128xbf16>,
    %c0_i32_11 = arith.constant 0 : i32
    %31 = arith.cmpi eq, %arg1, %c0_i32_11 : i32
    %32 = arith.extui %31 : i1 to i32
    %c0_i32_12 = arith.constant 0 : i32
    %33 = arith.cmpi ne, %32, %c0_i32_12 : i32
    scf.if %33 {
      %cst_29 = arith.constant 0.000000e+00 : bf16
      %62 = vector.broadcast %cst_29 : bf16 to vector<1x8x128xbf16>
      %c0_30 = arith.constant 0 : index
      %c8_31 = arith.constant 8 : index
      %c0_32 = arith.constant 0 : index
      %63 = vector.load %arg11[%c0_30, %c8_31, %c0_32] : memref<10x24x128xbf16, #tpu.memory_space<vmem>>, vector<1x8x128xbf16>
      tpu.vector_store %arg11[%c0_30, %c8_31, %c0_32], %62 {strides = array<i32>} : memref<10x24x128xbf16, #tpu.memory_space<vmem>>, vector<1x8x128xbf16>,
    } else {
    }
    %c0_i32_13 = arith.constant 0 : i32
    %34 = arith.cmpi eq, %arg1, %c0_i32_13 : i32
    %35 = arith.extui %34 : i1 to i32
    %c0_i32_14 = arith.constant 0 : i32
    %36 = arith.cmpi ne, %35, %c0_i32_14 : i32
    scf.if %36 {
      %cst_29 = arith.constant 0.000000e+00 : bf16
      %62 = vector.broadcast %cst_29 : bf16 to vector<1x8x128xbf16>
      %c9 = arith.constant 9 : index
      %c8_30 = arith.constant 8 : index
      %c0_31 = arith.constant 0 : index
      %63 = vector.load %arg11[%c9, %c8_30, %c0_31] : memref<10x24x128xbf16, #tpu.memory_space<vmem>>, vector<1x8x128xbf16>
      tpu.vector_store %arg11[%c9, %c8_30, %c0_31], %62 {strides = array<i32>} : memref<10x24x128xbf16, #tpu.memory_space<vmem>>, vector<1x8x128xbf16>,
    } else {
    }
    %c0_15 = arith.constant 0 : index
    %c0_16 = arith.constant 0 : index
    %c0_17 = arith.constant 0 : index
    %37 = vector.load %arg11[%c0_15, %c0_16, %c0_17] : memref<10x24x128xbf16, #tpu.memory_space<vmem>>, vector<10x24x128xbf16>
    %38 = vector.extract_strided_slice %37 {offsets = [0, 7, 0], sizes = [8, 8, 128], strides = [1, 1, 1]} : vector<10x24x128xbf16> to vector<8x8x128xbf16>
    %39 = vector.extract_strided_slice %37 {offsets = [0, 8, 0], sizes = [8, 8, 128], strides = [1, 1, 1]} : vector<10x24x128xbf16> to vector<8x8x128xbf16>
    %40 = vector.extract_strided_slice %37 {offsets = [0, 9, 0], sizes = [8, 8, 128], strides = [1, 1, 1]} : vector<10x24x128xbf16> to vector<8x8x128xbf16>
    %41 = vector.extract_strided_slice %37 {offsets = [1, 7, 0], sizes = [8, 8, 128], strides = [1, 1, 1]} : vector<10x24x128xbf16> to vector<8x8x128xbf16>
    %42 = vector.extract_strided_slice %37 {offsets = [1, 8, 0], sizes = [8, 8, 128], strides = [1, 1, 1]} : vector<10x24x128xbf16> to vector<8x8x128xbf16>
    %43 = vector.extract_strided_slice %37 {offsets = [1, 9, 0], sizes = [8, 8, 128], strides = [1, 1, 1]} : vector<10x24x128xbf16> to vector<8x8x128xbf16>
    %44 = vector.extract_strided_slice %37 {offsets = [2, 7, 0], sizes = [8, 8, 128], strides = [1, 1, 1]} : vector<10x24x128xbf16> to vector<8x8x128xbf16>
    %45 = vector.extract_strided_slice %37 {offsets = [2, 8, 0], sizes = [8, 8, 128], strides = [1, 1, 1]} : vector<10x24x128xbf16> to vector<8x8x128xbf16>
    %46 = vector.extract_strided_slice %37 {offsets = [2, 9, 0], sizes = [8, 8, 128], strides = [1, 1, 1]} : vector<10x24x128xbf16> to vector<8x8x128xbf16>
    %47 = tpu.concatenate %38, %39, %40, %41, %42, %43, %44, %45, %46 in 2 : vector<8x8x128xbf16>, vector<8x8x128xbf16>, vector<8x8x128xbf16>, vector<8x8x128xbf16>, vector<8x8x128xbf16>, vector<8x8x128xbf16>, vector<8x8x128xbf16>, vector<8x8x128xbf16>, vector<8x8x128xbf16> -> vector<8x8x1152xbf16>
    %48 = vector.shape_cast %47 : vector<8x8x1152xbf16> to vector<64x1152xbf16>
    %c0_18 = arith.constant 0 : index
    %c0_19 = arith.constant 0 : index
    %49 = vector.load %arg6[%c0_18, %c0_19] : memref<1152x128xbf16, #tpu.memory_space<vmem>>, vector<1152x128xbf16>
    %cst_20 = arith.constant dense<0.000000e+00> : vector<64x128xf32>
    %50 = tpu.matmul %48, %49, %cst_20 {dimension_numbers = #tpu.dot_dimension_numbers<[1], [0], [0], [1], [0, 0, 1, 1], [], []>} : vector<64x1152xbf16>, vector<1152x128xbf16>, vector<64x128xf32> -> vector<64x128xf32>
    %c0_21 = arith.constant 0 : index
    %c0_22 = arith.constant 0 : index
    %51 = vector.load %arg7[%c0_21, %c0_22] : memref<1x128xf32, #tpu.memory_space<vmem>>, vector<1x128xf32>
    %52 = vector.broadcast %51 : vector<1x128xf32> to vector<64x128xf32>
    %53 = arith.mulf %50, %52 : vector<64x128xf32>
    %c0_23 = arith.constant 0 : index
    %c0_24 = arith.constant 0 : index
    %54 = vector.load %arg8[%c0_23, %c0_24] : memref<1x128xf32, #tpu.memory_space<vmem>>, vector<1x128xf32>
    %55 = vector.broadcast %54 : vector<1x128xf32> to vector<64x128xf32>
    %56 = arith.addf %53, %55 : vector<64x128xf32>
    %cst_25 = arith.constant 0.000000e+00 : f32
    %57 = vector.broadcast %cst_25 : f32 to vector<64x128xf32>
    %58 = arith.maximumf %56, %57 : vector<64x128xf32>
    %c0_26 = arith.constant 0 : index
    %c0_27 = arith.constant 0 : index
    %c0_28 = arith.constant 0 : index
    %59 = vector.load %arg9[%c0_26, %c0_27, %c0_28] : memref<1x64x128xf32, #tpu.memory_space<vmem>>, vector<1x64x128xf32>
    %60 = vector.shape_cast %59 : vector<1x64x128xf32> to vector<64x128xf32>
    %61 = vector.shape_cast %58 : vector<64x128xf32> to vector<1x64x128xf32>
    tpu.vector_store %arg9[%c0_26, %c0_27, %c0_28], %61 {strides = array<i32>} : memref<1x64x128xf32, #tpu.memory_space<vmem>>, vector<1x64x128xf32>,
    return
  }
  func.func @transform_0(%arg0: i32, %arg1: i32) -> (i32, i32, i32, i32) {
    %c0_i32 = arith.constant 0 : i32
    %c0_i32_0 = arith.constant 0 : i32
    %c0_i32_1 = arith.constant 0 : i32
    %c0_i32_2 = arith.constant 0 : i32
    return %arg0, %c0_i32, %c0_i32_0, %c0_i32_1 : i32, i32, i32, i32
  }
  func.func @transform_1(%arg0: i32, %arg1: i32) -> (i32, i32) {
    %c0_i32 = arith.constant 0 : i32
    %c0_i32_0 = arith.constant 0 : i32
    %c0_i32_1 = arith.constant 0 : i32
    return %c0_i32, %c0_i32_0 : i32, i32
  }
  func.func @transform_2(%arg0: i32, %arg1: i32) -> (i32, i32) {
    %c0_i32 = arith.constant 0 : i32
    %c0_i32_0 = arith.constant 0 : i32
    %c0_i32_1 = arith.constant 0 : i32
    return %c0_i32, %c0_i32_0 : i32, i32
  }
  func.func @transform_3(%arg0: i32, %arg1: i32) -> (i32, i32) {
    %c0_i32 = arith.constant 0 : i32
    %c0_i32_0 = arith.constant 0 : i32
    %c0_i32_1 = arith.constant 0 : i32
    return %c0_i32, %c0_i32_0 : i32, i32
  }
  func.func @transform_4(%arg0: i32, %arg1: i32) -> (i32, i32) {
    %c0_i32 = arith.constant 0 : i32
    %c0_i32_0 = arith.constant 0 : i32
    %c0_i32_1 = arith.constant 0 : i32
    return %c0_i32, %c0_i32_0 : i32, i32
  }
  func.func @transform_5(%arg0: i32, %arg1: i32) -> (i32, i32) {
    %c0_i32 = arith.constant 0 : i32
    %c0_i32_0 = arith.constant 0 : i32
    %c0_i32_1 = arith.constant 0 : i32
    return %c0_i32, %c0_i32_0 : i32, i32
  }
  func.func @transform_6(%arg0: i32, %arg1: i32) -> (i32, i32) {
    %c0_i32 = arith.constant 0 : i32
    %c0_i32_0 = arith.constant 0 : i32
    %c0_i32_1 = arith.constant 0 : i32
    return %c0_i32, %c0_i32_0 : i32, i32
  }
  func.func @transform_7(%arg0: i32, %arg1: i32) -> (i32, i32, i32) {
    %c0_i32 = arith.constant 0 : i32
    %c0_i32_0 = arith.constant 0 : i32
    return %arg0, %arg1, %c0_i32 : i32, i32, i32
  }
}

</mosaic_0001>

<llo_original>
// kernel: tpu_custom_call.1
$region0: #{tpu_custom_call.1}
  #allocation0 [shape = 'u32[]', space=smem, size = 0x4, offset = 0x4, fixed_abs, tag = 'smem constant byte address 0x4 - core index']
  #allocation1 [shape = 'u32[72,128]{1,0:T(1,128)}', space=vmem, size = 0x9000, scoped, tag = 'internal scratch']
  #allocation2 [shape = 'bf16[12,24,4]{2,1,0:T(8,128)(2,1)}', space=vmem, size = 0x12000, scoped, tag = 'scratch operand']
  #allocation3 [shape = 'bf16[10,24,128]{2,1,0:T(8,128)(2,1)}', space=vmem, size = 0xf000, scoped, tag = 'scratch operand']
  %s0 = inlined_call_operand.vmem [shape: bf16[2,16,8,8], index: 0, kind: input, shape index: {}]
  %s1 = inlined_call_operand.vmem [shape: bf16[36,128], index: 1, kind: input, shape index: {}]
  %s2 = inlined_call_operand.vmem [shape: f32[1,128], index: 2, kind: input, shape index: {}]
  %s3 = inlined_call_operand.vmem [shape: f32[1,128], index: 3, kind: input, shape index: {}]
  %s4 = inlined_call_operand.hbm [shape: bf16[1152,128], index: 4, kind: input, shape index: {}]
  %s5 = inlined_call_operand.vmem [shape: f32[1,128], index: 5, kind: input, shape index: {}]
  %s6 = inlined_call_operand.vmem [shape: f32[1,128], index: 6, kind: input, shape index: {}]
  %s7 = inlined_call_operand.hbm [shape: f32[2,64,128], index: 7, kind: output, shape index: {}]
  %s8 = sld [smem:[#allocation0]]
  $region73: #{tpu_custom_call.1} parent=0
    _
  %s10 = ssub.s32 1, %s8
  %s11 = scalar_select 0, %s10, %s8
  $region1: #{tpu_custom_call.1} parent=0
    #allocation4 [shape = 'u8[294912]{0}', space=vmem, size = 0x48000, scoped, tag = 'input window, operand 4, single buffered']
    #allocation5 [shape = 's32[2]{0}', space=sflag, size = 0x8, scoped, tag = 'scoped memory for tpu_custom_call.1']
    #allocation6 [shape = 's32[2]{0}', space=sflag, size = 0x8, scoped, tag = 'scoped memory for tpu_custom_call.1']
    #allocation7 [shape = 'u8[65536]{0}', space=vmem, size = 0x10000, scoped, tag = 'output window, operand 0']
    %12 = vsyncpa [#allocation5], 0
    %13 = vsyncpa [#allocation6], 0
    %s14 = scalar_lea.sflag [#allocation6], 1
    %15 = vsyncpa %s14, 0
    loop: start=0, step=1, limit=4
    $region2: #{tpu_custom_call.1} parent=1 // loop_pre_header
      _
    $region3: #{tpu_custom_call.1} parent=1 // loop_header
      %s17 = sphi 0, %s21
      %p18 = scmp.ge.s32.totalorder %s17, 4
      %s24 = sphi 0, %s36
      %s25 = sphi 0, %s32
      %s26 = sphi 0, %s24
      %s27 = sphi 0, %s25
      %s28 = sphi 0, %s26
      %s29 = sphi 0, %s27
      %s39 = sphi 0, %s41
      %s42 = sphi 0, %s39
      %s43 = sphi 0, %s42
      %s59 = sphi 0, %s43
      %s63 = sphi 0, %s63
      %s65 = sphi 0, %s63
      %s66 = sphi 0, %s65
      %s80 = sphi 0, %s66
      %s84 = sphi 0, %s84
      %s86 = sphi 0, %s84
      %s87 = sphi 0, %s86
      %s101 = sphi 0, %s87
      %s105 = sphi 0, %s105
      %s107 = sphi 0, %s105
      %s108 = sphi 0, %s107
      %s122 = sphi 0, %s108
      %s126 = sphi 0, %s126
      %s128 = sphi 0, %s126
      %s129 = sphi 0, %s128
      %s143 = sphi 0, %s129
      %s147 = sphi 0, %s147
      %s149 = sphi 0, %s147
      %s150 = sphi 0, %s149
      %s164 = sphi 0, %s150
      %s168 = sphi 0, %s168
      %s170 = sphi 0, %s168
      %s171 = sphi 0, %s170
      %s185 = sphi 0, %s171
      %s193 = sphi 0, %s195
      %s196 = sphi 0, %s193
      %s197 = sphi 0, %s196
      %s213 = sphi 0, %s197
    $region4: #{tpu_custom_call.1} parent=1 // loop_header_branch
      %20 = sbr.rel (%p18) target = $region8
    $region5: #{tpu_custom_call.1} parent=1 // loop_body
      %s22 = ssub.s32 %s17, 1
      %s23 = ssub.s32 %s17, 2
      %s30 = sadd.s32 1, %s25
      %p31 = scmp.ge.s32.totalorder %s30, 1
      %s32 = scalar_select %p31, 0, %s30
      %s33 = sadd.s32 1, %s24
      %s34 = scalar_select %p31, %s33, %s24
      %p35 = scmp.ge.s32.totalorder %s34, 2
      %s36 = scalar_select %p35, 0, %s34
      %s37 = ssub.s32 %s24, %s36
      %p38 = scmp.eq.s32.totalorder %s37, 0
      %s40 = sadd.s32 %s39, 1
      %s41 = scalar_select %p38, %s39, %s40
      %p44 = pneg %p38
      %p45 = scmp.eq.s32.totalorder %s17, 1
      %p46 = por %p44, %p45
      %p47 = scmp.ne.s32.totalorder %s39, %s42
      %p48 = scmp.eq.s32.totalorder %s17, 0
      %p49 = por %p47, %p48
      %p50 = scmp.ne.s32.totalorder %s39, %s42
      %p51 = scmp.eq.s32.totalorder %s22, 1
      %p52 = por %p50, %p51
      %p53 = scmp.ne.s32.totalorder %s42, %s43
      %p54 = scmp.eq.s32.totalorder %s22, 0
      %p55 = por %p53, %p54
      %p56 = scmp.ne.s32.totalorder %s42, %s43
      %p57 = scmp.eq.s32.totalorder %s23, 1
      %p58 = por %p56, %p57
      %p60 = scmp.ne.s32.totalorder %s43, %s59
      %p61 = scmp.eq.s32.totalorder %s23, 0
      %p62 = por %p60, %p61
      %s64 = sadd.s32 %s63, 1
      %p67 = scmp.eq.s32.totalorder %s17, 1
      %p68 = scmp.ne.s32.totalorder %s63, %s65
      %p69 = scmp.eq.s32.totalorder %s17, 0
      %p70 = por %p68, %p69
      %p71 = scmp.ne.s32.totalorder %s63, %s65
      %p72 = scmp.eq.s32.totalorder %s22, 1
      %p73 = por %p71, %p72
      %p74 = scmp.ne.s32.totalorder %s65, %s66
      %p75 = scmp.eq.s32.totalorder %s22, 0
      %p76 = por %p74, %p75
      %p77 = scmp.ne.s32.totalorder %s65, %s66
      %p78 = scmp.eq.s32.totalorder %s23, 1
      %p79 = por %p77, %p78
      %p81 = scmp.ne.s32.totalorder %s66, %s80
      %p82 = scmp.eq.s32.totalorder %s23, 0
      %p83 = por %p81, %p82
      %s85 = sadd.s32 %s84, 1
      %p88 = scmp.eq.s32.totalorder %s17, 1
      %p89 = scmp.ne.s32.totalorder %s84, %s86
      %p90 = scmp.eq.s32.totalorder %s17, 0
      %p91 = por %p89, %p90
      %p92 = scmp.ne.s32.totalorder %s84, %s86
      %p93 = scmp.eq.s32.totalorder %s22, 1
      %p94 = por %p92, %p93
      %p95 = scmp.ne.s32.totalorder %s86, %s87
      %p96 = scmp.eq.s32.totalorder %s22, 0
      %p97 = por %p95, %p96
      %p98 = scmp.ne.s32.totalorder %s86, %s87
      %p99 = scmp.eq.s32.totalorder %s23, 1
      %p100 = por %p98, %p99
      %p102 = scmp.ne.s32.totalorder %s87, %s101
      %p103 = scmp.eq.s32.totalorder %s23, 0
      %p104 = por %p102, %p103
      %s106 = sadd.s32 %s105, 1
      %p109 = scmp.eq.s32.totalorder %s17, 1
      %p110 = scmp.ne.s32.totalorder %s105, %s107
      %p111 = scmp.eq.s32.totalorder %s17, 0
      %p112 = por %p110, %p111
      %p113 = scmp.ne.s32.totalorder %s105, %s107
      %p114 = scmp.eq.s32.totalorder %s22, 1
      %p115 = por %p113, %p114
      %p116 = scmp.ne.s32.totalorder %s107, %s108
      %p117 = scmp.eq.s32.totalorder %s22, 0
      %p118 = por %p116, %p117
      %p119 = scmp.ne.s32.totalorder %s107, %s108
      %p120 = scmp.eq.s32.totalorder %s23, 1
      %p121 = por %p119, %p120
      %p123 = scmp.ne.s32.totalorder %s108, %s122
      %p124 = scmp.eq.s32.totalorder %s23, 0
      %p125 = por %p123, %p124
      %s127 = sadd.s32 %s126, 1
      %p130 = scmp.eq.s32.totalorder %s17, 1
      %p131 = scmp.ne.s32.totalorder %s126, %s128
      %p132 = scmp.eq.s32.totalorder %s17, 0
      %p133 = por %p131, %p132
      %p134 = scmp.ne.s32.totalorder %s126, %s128
      %p135 = scmp.eq.s32.totalorder %s22, 1
      %p136 = por %p134, %p135
      %p137 = scmp.ne.s32.totalorder %s128, %s129
      %p138 = scmp.eq.s32.totalorder %s22, 0
      %p139 = por %p137, %p138
      %p140 = scmp.ne.s32.totalorder %s128, %s129
      %p141 = scmp.eq.s32.totalorder %s23, 1
      %p142 = por %p140, %p141
      %p144 = scmp.ne.s32.totalorder %s129, %s143
      %p145 = scmp.eq.s32.totalorder %s23, 0
      %p146 = por %p144, %p145
      %s148 = sadd.s32 %s147, 1
      %p151 = scmp.eq.s32.totalorder %s17, 1
      %p152 = scmp.ne.s32.totalorder %s147, %s149
      %p153 = scmp.eq.s32.totalorder %s17, 0
      %p154 = por %p152, %p153
      %p155 = scmp.ne.s32.totalorder %s147, %s149
      %p156 = scmp.eq.s32.totalorder %s22, 1
      %p157 = por %p155, %p156
      %p158 = scmp.ne.s32.totalorder %s149, %s150
      %p159 = scmp.eq.s32.totalorder %s22, 0
      %p160 = por %p158, %p159
      %p161 = scmp.ne.s32.totalorder %s149, %s150
      %p162 = scmp.eq.s32.totalorder %s23, 1
      %p163 = por %p161, %p162
      %p165 = scmp.ne.s32.totalorder %s150, %s164
      %p166 = scmp.eq.s32.totalorder %s23, 0
      %p167 = por %p165, %p166
      %s169 = sadd.s32 %s168, 1
      %p172 = scmp.eq.s32.totalorder %s17, 1
      %p173 = scmp.ne.s32.totalorder %s168, %s170
      %p174 = scmp.eq.s32.totalorder %s17, 0
      %p175 = por %p173, %p174
      %p176 = scmp.ne.s32.totalorder %s168, %s170
      %p177 = scmp.eq.s32.totalorder %s22, 1
      %p178 = por %p176, %p177
      %p179 = scmp.ne.s32.totalorder %s170, %s171
      %p180 = scmp.eq.s32.totalorder %s22, 0
      %p181 = por %p179, %p180
      %p182 = scmp.ne.s32.totalorder %s170, %s171
      %p183 = scmp.eq.s32.totalorder %s23, 1
      %p184 = por %p182, %p183
      %p186 = scmp.ne.s32.totalorder %s171, %s185
      %p187 = scmp.eq.s32.totalorder %s23, 0
      %p188 = por %p186, %p187
      %s189 = ssub.s32 %s24, %s36
      %s190 = ssub.s32 %s25, %s32
      %s191 = sor.u32 %s189, %s190
      %p192 = scmp.eq.s32.totalorder %s191, 0
      %s194 = sadd.s32 %s193, 1
      %s195 = scalar_select %p192, %s193, %s194
      %p198 = pneg %p192
      %p199 = scmp.eq.s32.totalorder %s17, 1
      %p200 = por %p198, %p199
      %p201 = scmp.ne.s32.totalorder %s193, %s196
      %p202 = scmp.eq.s32.totalorder %s17, 0
      %p203 = por %p201, %p202
      %p204 = scmp.ne.s32.totalorder %s193, %s196
      %p205 = scmp.eq.s32.totalorder %s22, 1
      %p206 = por %p204, %p205
      %p207 = scmp.ne.s32.totalorder %s196, %s197
      %p208 = scmp.eq.s32.totalorder %s22, 0
      %p209 = por %p207, %p208
      %p210 = scmp.ne.s32.totalorder %s196, %s197
      %p211 = scmp.eq.s32.totalorder %s23, 1
      %p212 = por %p210, %p211
      %p214 = scmp.ne.s32.totalorder %s197, %s213
      %p215 = scmp.eq.s32.totalorder %s23, 0
      %p216 = por %p214, %p215
      %p217 = scmp.le.s32.totalorder 1, %s17
      %p218 = scmp.lt.s32.totalorder %s17, 3
      %p219 = pnand %p217, %p218
      %p220 = pneg %p219
      // Predicated region
      $region9: #{tpu_custom_call.1} parent=5 // pred_check
        _
      $region10: #{tpu_custom_call.1} parent=5 // pred_check_branch
        %222 = sbr.rel (%p219) target = $region12
      $region11: #{tpu_custom_call.1} parent=5 // pred_region
        %s223 = ssub.s32 %s17, 1
        // Predicated region
        $region13: #{tpu_custom_call.1} parent=11 // pred_check
          %p224 = pneg %p76
        $region14: #{tpu_custom_call.1} parent=11 // pred_check_branch
          %226 = sbr.rel (%p224) target = $region16
        $region15: #{tpu_custom_call.1} parent=11 // pred_region
          _
        $region16: #{tpu_custom_call.1} parent=11 // pred_fallthru
          _
        // Predicated region
        $region17: #{tpu_custom_call.1} parent=11 // pred_check
          %p227 = pneg %p97
        $region18: #{tpu_custom_call.1} parent=11 // pred_check_branch
          %229 = sbr.rel (%p227) target = $region20
        $region19: #{tpu_custom_call.1} parent=11 // pred_region
          _
        $region20: #{tpu_custom_call.1} parent=11 // pred_fallthru
          _
        // Predicated region
        $region21: #{tpu_custom_call.1} parent=11 // pred_check
          %p230 = pneg %p118
        $region22: #{tpu_custom_call.1} parent=11 // pred_check_branch
          %232 = sbr.rel (%p230) target = $region24
        $region23: #{tpu_custom_call.1} parent=11 // pred_region
          _
        $region24: #{tpu_custom_call.1} parent=11 // pred_fallthru
          _
        // Predicated region
        $region25: #{tpu_custom_call.1} parent=11 // pred_check
          %p233 = pneg %p139
        $region26: #{tpu_custom_call.1} parent=11 // pred_check_branch
          %235 = sbr.rel (%p233) target = $region28
        $region27: #{tpu_custom_call.1} parent=11 // pred_region
          %237 = vsyncadd [#allocation5], 0
          %s238 = sshll.u32 %s4, 4
          %s239 = int_to_ptr.hbm [resolvable:$true] %s238
          %s240 = sshll.u32 [#allocation4], 4
          %s241 = int_to_ptr.vmem [resolvable:$true] %s240
          %246 = dma.hbm_to_vmem [thread:$0]  %s239, 9216, %s241, [#allocation5], 64, 64, 4
        $region28: #{tpu_custom_call.1} parent=11 // pred_fallthru
          _
        // Predicated region
        $region29: #{tpu_custom_call.1} parent=11 // pred_check
          %p247 = pneg %p160
        $region30: #{tpu_custom_call.1} parent=11 // pred_check_branch
          %249 = sbr.rel (%p247) target = $region32
        $region31: #{tpu_custom_call.1} parent=11 // pred_region
          _
        $region32: #{tpu_custom_call.1} parent=11 // pred_fallthru
          _
        // Predicated region
        $region33: #{tpu_custom_call.1} parent=11 // pred_check
          %p250 = pneg %p181
        $region34: #{tpu_custom_call.1} parent=11 // pred_check_branch
          %252 = sbr.rel (%p250) target = $region36
        $region35: #{tpu_custom_call.1} parent=11 // pred_region
          _
        $region36: #{tpu_custom_call.1} parent=11 // pred_fallthru
          _
      $region12: #{tpu_custom_call.1} parent=5 // pred_fallthru
        _
      %p253 = scmp.lt.s32.totalorder %s17, 2
      // Predicated region
      $region37: #{tpu_custom_call.1} parent=5 // pred_check
        %p254 = pneg %p253
      $region38: #{tpu_custom_call.1} parent=5 // pred_check_branch
        %256 = sbr.rel (%p254) target = $region40
      $region39: #{tpu_custom_call.1} parent=5 // pred_region
        // Predicated region
        $region41: #{tpu_custom_call.1} parent=39 // pred_check
          %p257 = pneg %p49
        $region42: #{tpu_custom_call.1} parent=39 // pred_check_branch
          %259 = sbr.rel (%p257) target = $region44
        $region43: #{tpu_custom_call.1} parent=39 // pred_region
          %p260 = scmp.lt.s32.totalorder %s24, 1
          %s261 = scalar_select %p260, %s24, 1
          %s262 = smul.addr %s261, 16
          %s263 = smul.addr %s262, 4
          %s264 = scalar_lea.vmem %s0, %s263
        $region44: #{tpu_custom_call.1} parent=39 // pred_fallthru
          _
      $region40: #{tpu_custom_call.1} parent=5 // pred_fallthru
        _
      %p265 = scmp.le.s32.totalorder 1, %s17
      %p266 = scmp.lt.s32.totalorder %s17, 3
      %p267 = pnand %p265, %p266
      %p268 = pneg %p267
      // Predicated region
      $region45: #{tpu_custom_call.1} parent=5 // pred_check
        _
      $region46: #{tpu_custom_call.1} parent=5 // pred_check_branch
        %270 = sbr.rel (%p267) target = $region48
      $region47: #{tpu_custom_call.1} parent=5 // pred_region
        %s271 = ssub.s32 %s17, 1
        // Predicated region
        $region49: #{tpu_custom_call.1} parent=47 // pred_check
          %p272 = pneg %p139
        $region50: #{tpu_custom_call.1} parent=47 // pred_check_branch
          %274 = sbr.rel (%p272) target = $region52
        $region51: #{tpu_custom_call.1} parent=47 // pred_region
          %276 = dma.done [#allocation5], 9216
        $region52: #{tpu_custom_call.1} parent=47 // pred_fallthru
          _
        %p277 = scmp.lt.s32.totalorder %s26, 1
        %s278 = scalar_select %p277, %s26, 1
        %s279 = smul.addr %s278, 16
        %s280 = smul.addr %s279, 4
        %s281 = scalar_lea.vmem %s0, %s280
        %p282 = pneg %p55
        %p283 = pneg %p52
        %p284 = pneg %p76
        %p285 = pneg %p73
        %p286 = pneg %p97
        %p287 = pneg %p94
        %p288 = pneg %p118
        %p289 = pneg %p115
        %p290 = pneg %p139
        %p291 = pneg %p136
        %p292 = pneg %p160
        %p293 = pneg %p157
        %p294 = pneg %p181
        %p295 = pneg %p178
        %p296 = pneg %p209
        %p297 = pneg %p206
        %s298 = sand.u32 %s196, 1
        %s299 = scalar_lea.sflag [#allocation6], %s298
        %s300 = sand.u32 %s196, 1
        %s301 = smul.addr %s300, 64
        %s302 = scalar_lea.vmem [#allocation7], %s301
        %p303 = scmp.lt.s32.totalorder %s26, 1
        %s304 = scalar_select %p303, %s26, 1
        %s305 = smul.addr %s304, 16
        %s306 = smul.addr %s305, 4
        %s307 = scalar_lea.vmem %s0, %s306
        %s308 = smul.u32 8, %s27
        %s310 = smul.u32 %s27, 8
        %p311 = scmp.eq.s32.totalorder %s27, 0
        // Predicated region
        $region53: #{tpu_custom_call.1} parent=47 // pred_check
          %p312 = pneg %p311
        $region54: #{tpu_custom_call.1} parent=47 // pred_check_branch
          %314 = sbr.rel (%p312) target = $region56
        $region55: #{tpu_custom_call.1} parent=47 // pred_region
          %vm315 = vcmask 27648
          %316 = vst.msk [vmem:[#allocation2] sm:$0xf] %vm315, 0
          %317 = vst.msk [vmem:[#allocation2 + $0x4] sm:$0xf] %vm315, 0
          %318 = vst.msk [vmem:[#allocation2 + $0x8] sm:$0xf] %vm315, 0
          %319 = vst.msk [vmem:[#allocation2 + $0xc] sm:$0xf] %vm315, 0
          %320 = vst.msk [vmem:[#allocation2 + $0x10] sm:$0xf] %vm315, 0
          %321 = vst.msk [vmem:[#allocation2 + $0x14] sm:$0xf] %vm315, 0
          %s322 = scalar_lea.vmem [#allocation2], 120
          %323 = vst.msk [vmem:[%s322] sm:$0xf] %vm315, 0
          %324 = vst.msk [vmem:[%s322 + $0x4] sm:$0xf] %vm315, 0
          %325 = vst.msk [vmem:[%s322 + $0x8] sm:$0xf] %vm315, 0
          %326 = vst.msk [vmem:[%s322 + $0xc] sm:$0xf] %vm315, 0
          %327 = vst.msk [vmem:[%s322 + $0x10] sm:$0xf] %vm315, 0
          %328 = vst.msk [vmem:[%s322 + $0x14] sm:$0xf] %vm315, 0
          %329 = vst.msk [vmem:[#allocation2] sm:$0xf] %vm315, 0
          %330 = vst.msk [vmem:[#allocation2 + $0xc] sm:$0xf] %vm315, 0
          %331 = vst.msk [vmem:[#allocation2 + $0x18] sm:$0xf] %vm315, 0
          %332 = vst.msk [vmem:[#allocation2 + $0x24] sm:$0xf] %vm315, 0
          %333 = vst.msk [vmem:[#allocation2 + $0x30] sm:$0xf] %vm315, 0
          %334 = vst.msk [vmem:[#allocation2 + $0x3c] sm:$0xf] %vm315, 0
          %335 = vst.msk [vmem:[#allocation2 + $0x48] sm:$0xf] %vm315, 0
          %336 = vst.msk [vmem:[#allocation2 + $0x54] sm:$0xf] %vm315, 0
          %337 = vst.msk [vmem:[#allocation2 + $0x60] sm:$0xf] %vm315, 0
          %338 = vst.msk [vmem:[#allocation2 + $0x6c] sm:$0xf] %vm315, 0
          %339 = vst.msk [vmem:[#allocation2 + $0x78] sm:$0xf] %vm315, 0
          %340 = vst.msk [vmem:[#allocation2 + $0x84] sm:$0xf] %vm315, 0
          %341 = vst.msk [vmem:[#allocation2 + $0x8] sm:$0xf] %vm315, 0
          %342 = vst.msk [vmem:[#allocation2 + $0x14] sm:$0xf] %vm315, 0
          %343 = vst.msk [vmem:[#allocation2 + $0x20] sm:$0xf] %vm315, 0
          %344 = vst.msk [vmem:[#allocation2 + $0x2c] sm:$0xf] %vm315, 0
          %345 = vst.msk [vmem:[#allocation2 + $0x38] sm:$0xf] %vm315, 0
          %346 = vst.msk [vmem:[#allocation2 + $0x44] sm:$0xf] %vm315, 0
          %347 = vst.msk [vmem:[#allocation2 + $0x50] sm:$0xf] %vm315, 0
          %348 = vst.msk [vmem:[#allocation2 + $0x5c] sm:$0xf] %vm315, 0
          %349 = vst.msk [vmem:[#allocation2 + $0x68] sm:$0xf] %vm315, 0
          %350 = vst.msk [vmem:[#allocation2 + $0x74] sm:$0xf] %vm315, 0
          %351 = vst.msk [vmem:[#allocation2 + $0x80] sm:$0xf] %vm315, 0
          %352 = vst.msk [vmem:[#allocation2 + $0x8c] sm:$0xf] %vm315, 0
          %353 = vst [vmem:[#allocation3] sm:$0xf] 0
          %354 = vst [vmem:[#allocation3 + $0xc] sm:$0xf] 0
          %355 = vst [vmem:[#allocation3 + $0x18] sm:$0xf] 0
          %356 = vst [vmem:[#allocation3 + $0x24] sm:$0xf] 0
          %357 = vst [vmem:[#allocation3 + $0x30] sm:$0xf] 0
          %358 = vst [vmem:[#allocation3 + $0x3c] sm:$0xf] 0
          %359 = vst [vmem:[#allocation3 + $0x48] sm:$0xf] 0
          %360 = vst [vmem:[#allocation3 + $0x54] sm:$0xf] 0
          %361 = vst [vmem:[#allocation3 + $0x60] sm:$0xf] 0
          %362 = vst [vmem:[#allocation3 + $0x6c] sm:$0xf] 0
          %363 = vst [vmem:[#allocation3 + $0x8] sm:$0xf] 0
          %364 = vst [vmem:[#allocation3 + $0x14] sm:$0xf] 0
          %365 = vst [vmem:[#allocation3 + $0x20] sm:$0xf] 0
          %366 = vst [vmem:[#allocation3 + $0x2c] sm:$0xf] 0
          %367 = vst [vmem:[#allocation3 + $0x38] sm:$0xf] 0
          %368 = vst [vmem:[#allocation3 + $0x44] sm:$0xf] 0
          %369 = vst [vmem:[#allocation3 + $0x50] sm:$0xf] 0
          %370 = vst [vmem:[#allocation3 + $0x5c] sm:$0xf] 0
          %371 = vst [vmem:[#allocation3 + $0x68] sm:$0xf] 0
          %372 = vst [vmem:[#allocation3 + $0x74] sm:$0xf] 0
          %v373 = vld [vmem:[%s307] sm:$0xf]
          %v374 = vld [vmem:[%s307 + $0x4] sm:$0xf]
          %v375 = vld [vmem:[%s307 + $0x8] sm:$0xf]
          %v376 = vld [vmem:[%s307 + $0xc] sm:$0xf]
          %v377 = vld [vmem:[%s307 + $0x10] sm:$0xf]
          %v378 = vld [vmem:[%s307 + $0x14] sm:$0xf]
          %v379 = vld [vmem:[%s307 + $0x18] sm:$0xf]
          %v380 = vld [vmem:[%s307 + $0x1c] sm:$0xf]
          %v381 = vld [vmem:[%s307 + $0x20] sm:$0xf]
          %v382 = vld [vmem:[%s307 + $0x24] sm:$0xf]
          %v383 = vld [vmem:[%s307 + $0x28] sm:$0xf]
          %v384 = vld [vmem:[%s307 + $0x2c] sm:$0xf]
          %v385 = vld [vmem:[%s307 + $0x30] sm:$0xf]
          %v386 = vld [vmem:[%s307 + $0x34] sm:$0xf]
          %v387 = vld [vmem:[%s307 + $0x38] sm:$0xf]
          %v388 = vld [vmem:[%s307 + $0x3c] sm:$0xf]
          %v389 = vunpack.c.l.bf16 %v373
          %v390 = vunpack.c.l.bf16 %v374
          %v391 = vunpack.c.l.bf16 %v375
          %v392 = vunpack.c.l.bf16 %v376
          %v393 = vunpack.c.l.bf16 %v377
          %v394 = vunpack.c.l.bf16 %v378
          %v395 = vunpack.c.l.bf16 %v379
          %v396 = vunpack.c.l.bf16 %v380
          %v397 = vunpack.c.l.bf16 %v381
          %v398 = vunpack.c.l.bf16 %v382
          %v399 = vunpack.c.l.bf16 %v383
          %v400 = vunpack.c.l.bf16 %v384
          %v401 = vunpack.c.l.bf16 %v385
          %v402 = vunpack.c.l.bf16 %v386
          %v403 = vunpack.c.l.bf16 %v387
          %v404 = vunpack.c.l.bf16 %v388
          %421 = vrot.lane.b32.xlu0 %v389, 124
          %v422 = vpop.permute.xlu0 %421
          %423 = vrot.lane.b32.xlu0 %v390, 124
          %v424 = vpop.permute.xlu0 %423
          %425 = vrot.lane.b32.xlu0 %v391, 124
          %v426 = vpop.permute.xlu0 %425
          %427 = vrot.lane.b32.xlu0 %v392, 124
          %v428 = vpop.permute.xlu0 %427
          %429 = vrot.lane.b32.xlu0 %v393, 124
          %v430 = vpop.permute.xlu0 %429
          %431 = vrot.lane.b32.xlu0 %v394, 124
          %v432 = vpop.permute.xlu0 %431
          %433 = vrot.lane.b32.xlu0 %v395, 124
          %v434 = vpop.permute.xlu0 %433
          %435 = vrot.lane.b32.xlu0 %v396, 124
          %v436 = vpop.permute.xlu0 %435
          %437 = vrot.lane.b32.xlu0 %v397, 124
          %v438 = vpop.permute.xlu0 %437
          %439 = vrot.lane.b32.xlu0 %v398, 124
          %v440 = vpop.permute.xlu0 %439
          %441 = vrot.lane.b32.xlu0 %v399, 124
          %v442 = vpop.permute.xlu0 %441
          %443 = vrot.lane.b32.xlu0 %v400, 124
          %v444 = vpop.permute.xlu0 %443
          %445 = vrot.lane.b32.xlu0 %v401, 124
          %v446 = vpop.permute.xlu0 %445
          %447 = vrot.lane.b32.xlu0 %v402, 124
          %v448 = vpop.permute.xlu0 %447
          %449 = vrot.lane.b32.xlu0 %v403, 124
          %v450 = vpop.permute.xlu0 %449
          %451 = vrot.lane.b32.xlu0 %v404, 124
          %v452 = vpop.permute.xlu0 %451
          %v469 = vmax.f32 %v389, %v422
          %v470 = vmax.f32 %v390, %v424
          %v471 = vmax.f32 %v391, %v426
          %v472 = vmax.f32 %v392, %v428
          %v473 = vmax.f32 %v393, %v430
          %v474 = vmax.f32 %v394, %v432
          %v475 = vmax.f32 %v395, %v434
          %v476 = vmax.f32 %v396, %v436
          %v477 = vmax.f32 %v397, %v438
          %v478 = vmax.f32 %v398, %v440
          %v479 = vmax.f32 %v399, %v442
          %v480 = vmax.f32 %v400, %v444
          %v481 = vmax.f32 %v401, %v446
          %v482 = vmax.f32 %v402, %v448
          %v483 = vmax.f32 %v403, %v450
          %v484 = vmax.f32 %v404, %v452
          %v485 = vpack.c.bf16 %v469, %v469
          %v486 = vpack.c.bf16 %v470, %v470
          %v487 = vpack.c.bf16 %v471, %v471
          %v488 = vpack.c.bf16 %v472, %v472
          %v489 = vpack.c.bf16 %v473, %v473
          %v490 = vpack.c.bf16 %v474, %v474
          %v491 = vpack.c.bf16 %v475, %v475
          %v492 = vpack.c.bf16 %v476, %v476
          %v493 = vpack.c.bf16 %v477, %v477
          %v494 = vpack.c.bf16 %v478, %v478
          %v495 = vpack.c.bf16 %v479, %v479
          %v496 = vpack.c.bf16 %v480, %v480
          %v497 = vpack.c.bf16 %v481, %v481
          %v498 = vpack.c.bf16 %v482, %v482
          %v499 = vpack.c.bf16 %v483, %v483
          %v500 = vpack.c.bf16 %v484, %v484
          %v501 = vunpack.c.l.bf16 %v485
          %v502 = vunpack.c.l.bf16 %v487
          %v503 = vunpack.c.l.bf16 %v489
          %v504 = vunpack.c.l.bf16 %v491
          %v505 = vunpack.c.l.bf16 %v493
          %v506 = vunpack.c.l.bf16 %v495
          %v507 = vunpack.c.l.bf16 %v497
          %v508 = vunpack.c.l.bf16 %v499
          %v509 = vunpack.c.l.bf16 %v486
          %v510 = vunpack.c.l.bf16 %v488
          %v511 = vunpack.c.l.bf16 %v490
          %v512 = vunpack.c.l.bf16 %v492
          %v513 = vunpack.c.l.bf16 %v494
          %v514 = vunpack.c.l.bf16 %v496
          %v515 = vunpack.c.l.bf16 %v498
          %v516 = vunpack.c.l.bf16 %v500
          %v517 = vmax.f32 %v501, %v509
          %v518 = vmax.f32 %v502, %v510
          %v519 = vmax.f32 %v503, %v511
          %v520 = vmax.f32 %v504, %v512
          %v521 = vmax.f32 %v505, %v513
          %v522 = vmax.f32 %v506, %v514
          %v523 = vmax.f32 %v507, %v515
          %v524 = vmax.f32 %v508, %v516
          %v525 = vpack.c.bf16 %v517, %v517
          %v526 = vpack.c.bf16 %v518, %v518
          %v527 = vpack.c.bf16 %v519, %v519
          %v528 = vpack.c.bf16 %v520, %v520
          %v529 = vpack.c.bf16 %v521, %v521
          %v530 = vpack.c.bf16 %v522, %v522
          %v531 = vpack.c.bf16 %v523, %v523
          %v532 = vpack.c.bf16 %v524, %v524
          %s533 = scalar_lea.vmem [#allocation2], 24
          %534 = vst.msk [vmem:[%s533 + $0x4] sm:$0xf] %vm315, %v525
          %535 = vst.msk [vmem:[%s533 + $0x10] sm:$0xf] %vm315, %v526
          %536 = vst.msk [vmem:[%s533 + $0x1c] sm:$0xf] %vm315, %v527
          %537 = vst.msk [vmem:[%s533 + $0x28] sm:$0xf] %vm315, %v528
          %538 = vst.msk [vmem:[%s533 + $0x34] sm:$0xf] %vm315, %v529
          %539 = vst.msk [vmem:[%s533 + $0x40] sm:$0xf] %vm315, %v530
          %540 = vst.msk [vmem:[%s533 + $0x4c] sm:$0xf] %vm315, %v531
          %541 = vst.msk [vmem:[%s533 + $0x58] sm:$0xf] %vm315, %v532
        $region56: #{tpu_custom_call.1} parent=47 // pred_fallthru
          _
        %s542 = smul.u32 %s310, 3
        %s543 = smul.addr %s542, 4
        %s544 = scalar_lea.vmem [#allocation2], %s543
        %v545 = vld [vmem:[%s544] sm:$0xf]
        %v546 = vld [vmem:[%s544 + $0x4] sm:$0xf]
        %v547 = vld [vmem:[%s544 + $0x8] sm:$0xf]
        %v548 = vld [vmem:[%s544 + $0xc] sm:$0xf]
        %v549 = vld [vmem:[%s544 + $0x10] sm:$0xf]
        %v550 = vld [vmem:[%s544 + $0x14] sm:$0xf]
        %v551 = vld [vmem:[%s544 + $0x18] sm:$0xf]
        %v552 = vld [vmem:[%s544 + $0x1c] sm:$0xf]
        %v553 = vld [vmem:[%s544 + $0x20] sm:$0xf]
        %v554 = vld [vmem:[%s544 + $0x24] sm:$0xf]
        %v555 = vld [vmem:[%s544 + $0x28] sm:$0xf]
        %v556 = vld [vmem:[%s544 + $0x2c] sm:$0xf]
        %v557 = vld [vmem:[%s544 + $0x30] sm:$0xf]
        %v558 = vld [vmem:[%s544 + $0x34] sm:$0xf]
        %v559 = vld [vmem:[%s544 + $0x38] sm:$0xf]
        %v560 = vld [vmem:[%s544 + $0x3c] sm:$0xf]
        %v561 = vld [vmem:[%s544 + $0x40] sm:$0xf]
        %v562 = vld [vmem:[%s544 + $0x44] sm:$0xf]
        %v563 = vld [vmem:[%s544 + $0x48] sm:$0xf]
        %v564 = vld [vmem:[%s544 + $0x4c] sm:$0xf]
        %v565 = vld [vmem:[%s544 + $0x50] sm:$0xf]
        %v566 = vld [vmem:[%s544 + $0x54] sm:$0xf]
        %v567 = vld [vmem:[%s544 + $0x58] sm:$0xf]
        %v568 = vld [vmem:[%s544 + $0x5c] sm:$0xf]
        %v569 = vld [vmem:[%s544 + $0x60] sm:$0xf]
        %v570 = vld [vmem:[%s544 + $0x64] sm:$0xf]
        %v571 = vld [vmem:[%s544 + $0x68] sm:$0xf]
        %v572 = vld [vmem:[%s544 + $0x6c] sm:$0xf]
        %v573 = vld [vmem:[%s544 + $0x70] sm:$0xf]
        %v574 = vld [vmem:[%s544 + $0x74] sm:$0xf]
        %v575 = vld [vmem:[%s544 + $0x78] sm:$0xf]
        %v576 = vld [vmem:[%s544 + $0x7c] sm:$0xf]
        %v577 = vld [vmem:[%s544 + $0x80] sm:$0xf]
        %v578 = vld [vmem:[%s544 + $0x84] sm:$0xf]
        %v579 = vld [vmem:[%s544 + $0x88] sm:$0xf]
        %v580 = vld [vmem:[%s544 + $0x8c] sm:$0xf]
        %v601 = vunpack.c.l.b16 %v545
        %v602 = vunpack.c.l.b16 %v546
        %v603 = vunpack.c.l.b16 %v548
        %v604 = vunpack.c.l.b16 %v549
        %v605 = vunpack.c.l.b16 %v551
        %v606 = vunpack.c.l.b16 %v552
        %v607 = vunpack.c.l.b16 %v554
        %v608 = vunpack.c.l.b16 %v555
        %v609 = vunpack.c.l.b16 %v557
        %v610 = vunpack.c.l.b16 %v558
        %v611 = vunpack.c.l.b16 %v560
        %v612 = vunpack.c.l.b16 %v561
        %v613 = vunpack.c.l.b16 %v563
        %v614 = vunpack.c.l.b16 %v564
        %v615 = vunpack.c.l.b16 %v566
        %v616 = vunpack.c.l.b16 %v567
        %v617 = vunpack.c.l.b16 %v569
        %v618 = vunpack.c.l.b16 %v570
        %v619 = vunpack.c.l.b16 %v572
        %v620 = vunpack.c.l.b16 %v573
        %v621 = vpack.c.b16 %v602, %v601
        %v622 = vpack.c.b16 %v604, %v603
        %v623 = vpack.c.b16 %v606, %v605
        %v624 = vpack.c.b16 %v608, %v607
        %v625 = vpack.c.b16 %v610, %v609
        %v626 = vpack.c.b16 %v612, %v611
        %v627 = vpack.c.b16 %v614, %v613
        %v628 = vpack.c.b16 %v616, %v615
        %v629 = vpack.c.b16 %v618, %v617
        %v630 = vpack.c.b16 %v620, %v619
        %v631 = vpack.c.b16 %v602, %v602
        %v632 = vpack.c.b16 %v604, %v604
        %v633 = vpack.c.b16 %v606, %v606
        %v634 = vpack.c.b16 %v608, %v608
        %v635 = vpack.c.b16 %v610, %v610
        %v636 = vpack.c.b16 %v612, %v612
        %v637 = vpack.c.b16 %v614, %v614
        %v638 = vpack.c.b16 %v616, %v616
        %v639 = vpack.c.b16 %v618, %v618
        %v640 = vpack.c.b16 %v620, %v620
        %v642 = vshrl.u32 %v631, 16
        %v644 = vrot.slane %v642, 4
        %v645 = vshll.u32 %v631, 16
        %v647 = vrot.slane %v645, 5
        %v648 = vor.u32 %v644, %v647
        %v650 = vshrl.u32 %v632, 16
        %v652 = vrot.slane %v650, 4
        %v653 = vshll.u32 %v632, 16
        %v655 = vrot.slane %v653, 5
        %v656 = vor.u32 %v652, %v655
        %v658 = vshrl.u32 %v633, 16
        %v660 = vrot.slane %v658, 4
        %v661 = vshll.u32 %v633, 16
        %v663 = vrot.slane %v661, 5
        %v664 = vor.u32 %v660, %v663
        %v666 = vshrl.u32 %v634, 16
        %v668 = vrot.slane %v666, 4
        %v669 = vshll.u32 %v634, 16
        %v671 = vrot.slane %v669, 5
        %v672 = vor.u32 %v668, %v671
        %v674 = vshrl.u32 %v635, 16
        %v676 = vrot.slane %v674, 4
        %v677 = vshll.u32 %v635, 16
        %v679 = vrot.slane %v677, 5
        %v680 = vor.u32 %v676, %v679
        %v682 = vshrl.u32 %v636, 16
        %v684 = vrot.slane %v682, 4
        %v685 = vshll.u32 %v636, 16
        %v687 = vrot.slane %v685, 5
        %v688 = vor.u32 %v684, %v687
        %v690 = vshrl.u32 %v637, 16
        %v692 = vrot.slane %v690, 4
        %v693 = vshll.u32 %v637, 16
        %v695 = vrot.slane %v693, 5
        %v696 = vor.u32 %v692, %v695
        %v698 = vshrl.u32 %v638, 16
        %v700 = vrot.slane %v698, 4
        %v701 = vshll.u32 %v638, 16
        %v703 = vrot.slane %v701, 5
        %v704 = vor.u32 %v700, %v703
        %v706 = vshrl.u32 %v639, 16
        %v708 = vrot.slane %v706, 4
        %v709 = vshll.u32 %v639, 16
        %v711 = vrot.slane %v709, 5
        %v712 = vor.u32 %v708, %v711
        %v714 = vshrl.u32 %v640, 16
        %v716 = vrot.slane %v714, 4
        %v717 = vshll.u32 %v640, 16
        %v719 = vrot.slane %v717, 5
        %v720 = vor.u32 %v716, %v719
        %721 = vrot.lane.b32.xlu0 %v648, 4
        %v722 = vpop.permute.xlu0 %721
        %723 = vrot.lane.b32.xlu0 %v656, 4
        %v724 = vpop.permute.xlu0 %723
        %725 = vrot.lane.b32.xlu0 %v664, 4
        %v726 = vpop.permute.xlu0 %725
        %727 = vrot.lane.b32.xlu0 %v672, 4
        %v728 = vpop.permute.xlu0 %727
        %729 = vrot.lane.b32.xlu0 %v680, 4
        %v730 = vpop.permute.xlu0 %729
        %731 = vrot.lane.b32.xlu0 %v688, 4
        %v732 = vpop.permute.xlu0 %731
        %733 = vrot.lane.b32.xlu0 %v696, 4
        %v734 = vpop.permute.xlu0 %733
        %735 = vrot.lane.b32.xlu0 %v704, 4
        %v736 = vpop.permute.xlu0 %735
        %737 = vrot.lane.b32.xlu0 %v712, 4
        %v738 = vpop.permute.xlu0 %737
        %739 = vrot.lane.b32.xlu0 %v720, 4
        %v740 = vpop.permute.xlu0 %739
        %v751 = vunpack.c.l.b16 %v547
        %v752 = vunpack.c.l.b16 %v550
        %v753 = vunpack.c.l.b16 %v553
        %v754 = vunpack.c.l.b16 %v556
        %v755 = vunpack.c.l.b16 %v559
        %v756 = vunpack.c.l.b16 %v562
        %v757 = vunpack.c.l.b16 %v565
        %v758 = vunpack.c.l.b16 %v568
        %v759 = vunpack.c.l.b16 %v571
        %v760 = vunpack.c.l.b16 %v574
        %v761 = vpack.c.b16 %v751, %v602
        %v762 = vpack.c.b16 %v752, %v604
        %v763 = vpack.c.b16 %v753, %v606
        %v764 = vpack.c.b16 %v754, %v608
        %v765 = vpack.c.b16 %v755, %v610
        %v766 = vpack.c.b16 %v756, %v612
        %v767 = vpack.c.b16 %v757, %v614
        %v768 = vpack.c.b16 %v758, %v616
        %v769 = vpack.c.b16 %v759, %v618
        %v770 = vpack.c.b16 %v760, %v620
        %v771 = vrot.slane %v761, 5
        %v772 = vrot.slane %v762, 5
        %v773 = vrot.slane %v763, 5
        %v774 = vrot.slane %v764, 5
        %v775 = vrot.slane %v765, 5
        %v776 = vrot.slane %v766, 5
        %v777 = vrot.slane %v767, 5
        %v778 = vrot.slane %v768, 5
        %v779 = vrot.slane %v769, 5
        %v780 = vrot.slane %v770, 5
        %781 = vrot.lane.b32.xlu0 %v771, 8
        %v782 = vpop.permute.xlu0 %781
        %783 = vrot.lane.b32.xlu0 %v772, 8
        %v784 = vpop.permute.xlu0 %783
        %785 = vrot.lane.b32.xlu0 %v773, 8
        %v786 = vpop.permute.xlu0 %785
        %787 = vrot.lane.b32.xlu0 %v774, 8
        %v788 = vpop.permute.xlu0 %787
        %789 = vrot.lane.b32.xlu0 %v775, 8
        %v790 = vpop.permute.xlu0 %789
        %791 = vrot.lane.b32.xlu0 %v776, 8
        %v792 = vpop.permute.xlu0 %791
        %793 = vrot.lane.b32.xlu0 %v777, 8
        %v794 = vpop.permute.xlu0 %793
        %795 = vrot.lane.b32.xlu0 %v778, 8
        %v796 = vpop.permute.xlu0 %795
        %797 = vrot.lane.b32.xlu0 %v779, 8
        %v798 = vpop.permute.xlu0 %797
        %799 = vrot.lane.b32.xlu0 %v780, 8
        %v800 = vpop.permute.xlu0 %799
        %v803 = vunpack.c.l.b16 %v575
        %v804 = vunpack.c.l.b16 %v576
        %v805 = vpack.c.b16 %v804, %v803
        %806 = vrot.lane.b32.xlu0 %v622, 12
        %v807 = vpop.permute.xlu0 %806
        %808 = vrot.lane.b32.xlu0 %v623, 12
        %v809 = vpop.permute.xlu0 %808
        %810 = vrot.lane.b32.xlu0 %v624, 12
        %v811 = vpop.permute.xlu0 %810
        %812 = vrot.lane.b32.xlu0 %v625, 12
        %v813 = vpop.permute.xlu0 %812
        %814 = vrot.lane.b32.xlu0 %v626, 12
        %v815 = vpop.permute.xlu0 %814
        %816 = vrot.lane.b32.xlu0 %v627, 12
        %v817 = vpop.permute.xlu0 %816
        %818 = vrot.lane.b32.xlu0 %v628, 12
        %v819 = vpop.permute.xlu0 %818
        %820 = vrot.lane.b32.xlu0 %v629, 12
        %v821 = vpop.permute.xlu0 %820
        %822 = vrot.lane.b32.xlu0 %v630, 12
        %v823 = vpop.permute.xlu0 %822
        %824 = vrot.lane.b32.xlu0 %v805, 12
        %v825 = vpop.permute.xlu0 %824
        %v826 = vpack.c.b16 %v804, %v804
        %v828 = vshrl.u32 %v826, 16
        %v830 = vrot.slane %v828, 4
        %v831 = vshll.u32 %v826, 16
        %v833 = vrot.slane %v831, 5
        %v834 = vor.u32 %v830, %v833
        %835 = vrot.lane.b32.xlu0 %v656, 16
        %v836 = vpop.permute.xlu0 %835
        %837 = vrot.lane.b32.xlu0 %v664, 16
        %v838 = vpop.permute.xlu0 %837
        %839 = vrot.lane.b32.xlu0 %v672, 16
        %v840 = vpop.permute.xlu0 %839
        %841 = vrot.lane.b32.xlu0 %v680, 16
        %v842 = vpop.permute.xlu0 %841
        %843 = vrot.lane.b32.xlu0 %v688, 16
        %v844 = vpop.permute.xlu0 %843
        %845 = vrot.lane.b32.xlu0 %v696, 16
        %v846 = vpop.permute.xlu0 %845
        %847 = vrot.lane.b32.xlu0 %v704, 16
        %v848 = vpop.permute.xlu0 %847
        %849 = vrot.lane.b32.xlu0 %v712, 16
        %v850 = vpop.permute.xlu0 %849
        %851 = vrot.lane.b32.xlu0 %v720, 16
        %v852 = vpop.permute.xlu0 %851
        %853 = vrot.lane.b32.xlu0 %v834, 16
        %v854 = vpop.permute.xlu0 %853
        %v856 = vunpack.c.l.b16 %v577
        %v857 = vpack.c.b16 %v856, %v804
        %v858 = vrot.slane %v857, 5
        %859 = vrot.lane.b32.xlu0 %v772, 20
        %v860 = vpop.permute.xlu0 %859
        %861 = vrot.lane.b32.xlu0 %v773, 20
        %v862 = vpop.permute.xlu0 %861
        %863 = vrot.lane.b32.xlu0 %v774, 20
        %v864 = vpop.permute.xlu0 %863
        %865 = vrot.lane.b32.xlu0 %v775, 20
        %v866 = vpop.permute.xlu0 %865
        %867 = vrot.lane.b32.xlu0 %v776, 20
        %v868 = vpop.permute.xlu0 %867
        %869 = vrot.lane.b32.xlu0 %v777, 20
        %v870 = vpop.permute.xlu0 %869
        %871 = vrot.lane.b32.xlu0 %v778, 20
        %v872 = vpop.permute.xlu0 %871
        %873 = vrot.lane.b32.xlu0 %v779, 20
        %v874 = vpop.permute.xlu0 %873
        %875 = vrot.lane.b32.xlu0 %v780, 20
        %v876 = vpop.permute.xlu0 %875
        %877 = vrot.lane.b32.xlu0 %v858, 20
        %v878 = vpop.permute.xlu0 %877
        %v881 = vunpack.c.l.b16 %v578
        %v882 = vunpack.c.l.b16 %v579
        %v883 = vpack.c.b16 %v882, %v881
        %884 = vrot.lane.b32.xlu0 %v623, 24
        %v885 = vpop.permute.xlu0 %884
        %886 = vrot.lane.b32.xlu0 %v624, 24
        %v887 = vpop.permute.xlu0 %886
        %888 = vrot.lane.b32.xlu0 %v625, 24
        %v889 = vpop.permute.xlu0 %888
        %890 = vrot.lane.b32.xlu0 %v626, 24
        %v891 = vpop.permute.xlu0 %890
        %892 = vrot.lane.b32.xlu0 %v627, 24
        %v893 = vpop.permute.xlu0 %892
        %894 = vrot.lane.b32.xlu0 %v628, 24
        %v895 = vpop.permute.xlu0 %894
        %896 = vrot.lane.b32.xlu0 %v629, 24
        %v897 = vpop.permute.xlu0 %896
        %898 = vrot.lane.b32.xlu0 %v630, 24
        %v899 = vpop.permute.xlu0 %898
        %900 = vrot.lane.b32.xlu0 %v805, 24
        %v901 = vpop.permute.xlu0 %900
        %902 = vrot.lane.b32.xlu0 %v883, 24
        %v903 = vpop.permute.xlu0 %902
        %v904 = vpack.c.b16 %v882, %v882
        %v906 = vshrl.u32 %v904, 16
        %v908 = vrot.slane %v906, 4
        %v909 = vshll.u32 %v904, 16
        %v911 = vrot.slane %v909, 5
        %v912 = vor.u32 %v908, %v911
        %913 = vrot.lane.b32.xlu0 %v664, 28
        %v914 = vpop.permute.xlu0 %913
        %915 = vrot.lane.b32.xlu0 %v672, 28
        %v916 = vpop.permute.xlu0 %915
        %917 = vrot.lane.b32.xlu0 %v680, 28
        %v918 = vpop.permute.xlu0 %917
        %919 = vrot.lane.b32.xlu0 %v688, 28
        %v920 = vpop.permute.xlu0 %919
        %921 = vrot.lane.b32.xlu0 %v696, 28
        %v922 = vpop.permute.xlu0 %921
        %923 = vrot.lane.b32.xlu0 %v704, 28
        %v924 = vpop.permute.xlu0 %923
        %925 = vrot.lane.b32.xlu0 %v712, 28
        %v926 = vpop.permute.xlu0 %925
        %927 = vrot.lane.b32.xlu0 %v720, 28
        %v928 = vpop.permute.xlu0 %927
        %929 = vrot.lane.b32.xlu0 %v834, 28
        %v930 = vpop.permute.xlu0 %929
        %931 = vrot.lane.b32.xlu0 %v912, 28
        %v932 = vpop.permute.xlu0 %931
        %v934 = vunpack.c.l.b16 %v580
        %v935 = vpack.c.b16 %v934, %v882
        %v936 = vrot.slane %v935, 5
        %937 = vrot.lane.b32.xlu0 %v773, 32
        %v938 = vpop.permute.xlu0 %937
        %939 = vrot.lane.b32.xlu0 %v774, 32
        %v940 = vpop.permute.xlu0 %939
        %941 = vrot.lane.b32.xlu0 %v775, 32
        %v942 = vpop.permute.xlu0 %941
        %943 = vrot.lane.b32.xlu0 %v776, 32
        %v944 = vpop.permute.xlu0 %943
        %945 = vrot.lane.b32.xlu0 %v777, 32
        %v946 = vpop.permute.xlu0 %945
        %947 = vrot.lane.b32.xlu0 %v778, 32
        %v948 = vpop.permute.xlu0 %947
        %949 = vrot.lane.b32.xlu0 %v779, 32
        %v950 = vpop.permute.xlu0 %949
        %951 = vrot.lane.b32.xlu0 %v780, 32
        %v952 = vpop.permute.xlu0 %951
        %953 = vrot.lane.b32.xlu0 %v858, 32
        %v954 = vpop.permute.xlu0 %953
        %955 = vrot.lane.b32.xlu0 %v936, 32
        %v956 = vpop.permute.xlu0 %955
        %vm957 = vcmask 31744
        %v960 = vsel %vm957, %v621, %v722
        %v963 = vsel %vm957, %v622, %v724
        %v966 = vsel %vm957, %v623, %v726
        %v969 = vsel %vm957, %v624, %v728
        %v972 = vsel %vm957, %v625, %v730
        %v975 = vsel %vm957, %v626, %v732
        %v978 = vsel %vm957, %v627, %v734
        %v981 = vsel %vm957, %v628, %v736
        %v984 = vsel %vm957, %v629, %v738
        %v987 = vsel %vm957, %v630, %v740
        %vm988 = vcmask 64512
        %v990 = vsel %vm988, %v960, %v782
        %v992 = vsel %vm988, %v963, %v784
        %v994 = vsel %vm988, %v966, %v786
        %v996 = vsel %vm988, %v969, %v788
        %v998 = vsel %vm988, %v972, %v790
        %v1000 = vsel %vm988, %v975, %v792
        %v1002 = vsel %vm988, %v978, %v794
        %v1004 = vsel %vm988, %v981, %v796
        %v1006 = vsel %vm988, %v984, %v798
        %v1008 = vsel %vm988, %v987, %v800
        %vm1009 = vcmask 97280
        %v1011 = vsel %vm1009, %v990, %v807
        %v1013 = vsel %vm1009, %v992, %v809
        %v1015 = vsel %vm1009, %v994, %v811
        %v1017 = vsel %vm1009, %v996, %v813
        %v1019 = vsel %vm1009, %v998, %v815
        %v1021 = vsel %vm1009, %v1000, %v817
        %v1023 = vsel %vm1009, %v1002, %v819
        %v1025 = vsel %vm1009, %v1004, %v821
        %v1027 = vsel %vm1009, %v1006, %v823
        %v1029 = vsel %vm1009, %v1008, %v825
        %vm1030 = vcmask 130048
        %v1032 = vsel %vm1030, %v1011, %v836
        %v1034 = vsel %vm1030, %v1013, %v838
        %v1036 = vsel %vm1030, %v1015, %v840
        %v1038 = vsel %vm1030, %v1017, %v842
        %v1040 = vsel %vm1030, %v1019, %v844
        %v1042 = vsel %vm1030, %v1021, %v846
        %v1044 = vsel %vm1030, %v1023, %v848
        %v1046 = vsel %vm1030, %v1025, %v850
        %v1048 = vsel %vm1030, %v1027, %v852
        %v1050 = vsel %vm1030, %v1029, %v854
        %vm1051 = vcmask 162816
        %v1053 = vsel %vm1051, %v1032, %v860
        %v1055 = vsel %vm1051, %v1034, %v862
        %v1057 = vsel %vm1051, %v1036, %v864
        %v1059 = vsel %vm1051, %v1038, %v866
        %v1061 = vsel %vm1051, %v1040, %v868
        %v1063 = vsel %vm1051, %v1042, %v870
        %v1065 = vsel %vm1051, %v1044, %v872
        %v1067 = vsel %vm1051, %v1046, %v874
        %v1069 = vsel %vm1051, %v1048, %v876
        %v1071 = vsel %vm1051, %v1050, %v878
        %vm1072 = vcmask 195584
        %v1074 = vsel %vm1072, %v1053, %v885
        %v1076 = vsel %vm1072, %v1055, %v887
        %v1078 = vsel %vm1072, %v1057, %v889
        %v1080 = vsel %vm1072, %v1059, %v891
        %v1082 = vsel %vm1072, %v1061, %v893
        %v1084 = vsel %vm1072, %v1063, %v895
        %v1086 = vsel %vm1072, %v1065, %v897
        %v1088 = vsel %vm1072, %v1067, %v899
        %v1090 = vsel %vm1072, %v1069, %v901
        %v1092 = vsel %vm1072, %v1071, %v903
        %vm1093 = vcmask 228352
        %v1095 = vsel %vm1093, %v1074, %v914
        %v1097 = vsel %vm1093, %v1076, %v916
        %v1099 = vsel %vm1093, %v1078, %v918
        %v1101 = vsel %vm1093, %v1080, %v920
        %v1103 = vsel %vm1093, %v1082, %v922
        %v1105 = vsel %vm1093, %v1084, %v924
        %v1107 = vsel %vm1093, %v1086, %v926
        %v1109 = vsel %vm1093, %v1088, %v928
        %v1111 = vsel %vm1093, %v1090, %v930
        %v1113 = vsel %vm1093, %v1092, %v932
        %vm1114 = vcmask 261120
        %v1116 = vsel %vm1114, %v1095, %v938
        %v1118 = vsel %vm1114, %v1097, %v940
        %v1120 = vsel %vm1114, %v1099, %v942
        %v1122 = vsel %vm1114, %v1101, %v944
        %v1124 = vsel %vm1114, %v1103, %v946
        %v1126 = vsel %vm1114, %v1105, %v948
        %v1128 = vsel %vm1114, %v1107, %v950
        %v1130 = vsel %vm1114, %v1109, %v952
        %v1132 = vsel %vm1114, %v1111, %v954
        %v1134 = vsel %vm1114, %v1113, %v956
        %v1145 = vunpack.c.l.b16 %v1116
        %v1146 = vunpack.c.h.b16 %v1116
        %v1147 = vunpack.c.l.b16 %v1118
        %v1148 = vunpack.c.h.b16 %v1118
        %v1149 = vunpack.c.l.b16 %v1120
        %v1150 = vunpack.c.h.b16 %v1120
        %v1151 = vunpack.c.l.b16 %v1122
        %v1152 = vunpack.c.h.b16 %v1122
        %v1153 = vunpack.c.l.b16 %v1124
        %v1154 = vunpack.c.h.b16 %v1124
        %v1155 = vunpack.c.l.b16 %v1126
        %v1156 = vunpack.c.h.b16 %v1126
        %v1157 = vunpack.c.l.b16 %v1128
        %v1158 = vunpack.c.h.b16 %v1128
        %v1159 = vunpack.c.l.b16 %v1130
        %v1160 = vunpack.c.h.b16 %v1130
        %v1161 = vunpack.c.l.b16 %v1132
        %v1162 = vunpack.c.h.b16 %v1132
        %v1163 = vunpack.c.l.b16 %v1134
        %v1164 = vunpack.c.h.b16 %v1134
        %v1165 = vpack.c.b16 %v1145, %v1145
        %v1166 = vpack.c.b16 %v1146, %v1146
        %v1167 = vpack.c.b16 %v1147, %v1147
        %v1168 = vpack.c.b16 %v1148, %v1148
        %v1169 = vpack.c.b16 %v1149, %v1149
        %v1170 = vpack.c.b16 %v1150, %v1150
        %v1171 = vpack.c.b16 %v1151, %v1151
        %v1172 = vpack.c.b16 %v1152, %v1152
        %v1173 = vpack.c.b16 %v1153, %v1153
        %v1174 = vpack.c.b16 %v1154, %v1154
        %v1175 = vpack.c.b16 %v1155, %v1155
        %v1176 = vpack.c.b16 %v1156, %v1156
        %v1177 = vpack.c.b16 %v1157, %v1157
        %v1178 = vpack.c.b16 %v1158, %v1158
        %v1179 = vpack.c.b16 %v1159, %v1159
        %v1180 = vpack.c.b16 %v1160, %v1160
        %v1181 = vpack.c.b16 %v1161, %v1161
        %v1182 = vpack.c.b16 %v1162, %v1162
        %v1183 = vpack.c.b16 %v1163, %v1163
        %v1184 = vpack.c.b16 %v1164, %v1164
        %vm1185 = vsmask.f32 256
        %vm1186 = vsmask.f32 4368
        %vm1187 = vmor %vm1185, %vm1186
        %v1189 = vshrl.u32 %v1165, 16
        %v1191 = vrot.slane %v1189, 7
        %v1192 = vrot.slane %v1191, 4
        %v1194 = vshrl.u32 %v1166, 16
        %v1196 = vrot.slane %v1194, 7
        %v1197 = vshll.u32 %v1166, 16
        %v1199 = vor.u32 %v1196, %v1197
        %v1200 = vsel %vm1187, %v1192, %v1199
        %v1202 = vshrl.u32 %v1167, 16
        %v1204 = vrot.slane %v1202, 7
        %v1205 = vrot.slane %v1204, 4
        %v1207 = vshrl.u32 %v1168, 16
        %v1209 = vrot.slane %v1207, 7
        %v1210 = vshll.u32 %v1168, 16
        %v1212 = vor.u32 %v1209, %v1210
        %v1213 = vsel %vm1187, %v1205, %v1212
        %v1215 = vshrl.u32 %v1169, 16
        %v1217 = vrot.slane %v1215, 7
        %v1218 = vrot.slane %v1217, 4
        %v1220 = vshrl.u32 %v1170, 16
        %v1222 = vrot.slane %v1220, 7
        %v1223 = vshll.u32 %v1170, 16
        %v1225 = vor.u32 %v1222, %v1223
        %v1226 = vsel %vm1187, %v1218, %v1225
        %v1228 = vshrl.u32 %v1171, 16
        %v1230 = vrot.slane %v1228, 7
        %v1231 = vrot.slane %v1230, 4
        %v1233 = vshrl.u32 %v1172, 16
        %v1235 = vrot.slane %v1233, 7
        %v1236 = vshll.u32 %v1172, 16
        %v1238 = vor.u32 %v1235, %v1236
        %v1239 = vsel %vm1187, %v1231, %v1238
        %v1241 = vshrl.u32 %v1173, 16
        %v1243 = vrot.slane %v1241, 7
        %v1244 = vrot.slane %v1243, 4
        %v1246 = vshrl.u32 %v1174, 16
        %v1248 = vrot.slane %v1246, 7
        %v1249 = vshll.u32 %v1174, 16
        %v1251 = vor.u32 %v1248, %v1249
        %v1252 = vsel %vm1187, %v1244, %v1251
        %v1254 = vshrl.u32 %v1175, 16
        %v1256 = vrot.slane %v1254, 7
        %v1257 = vrot.slane %v1256, 4
        %v1259 = vshrl.u32 %v1176, 16
        %v1261 = vrot.slane %v1259, 7
        %v1262 = vshll.u32 %v1176, 16
        %v1264 = vor.u32 %v1261, %v1262
        %v1265 = vsel %vm1187, %v1257, %v1264
        %v1267 = vshrl.u32 %v1177, 16
        %v1269 = vrot.slane %v1267, 7
        %v1270 = vrot.slane %v1269, 4
        %v1272 = vshrl.u32 %v1178, 16
        %v1274 = vrot.slane %v1272, 7
        %v1275 = vshll.u32 %v1178, 16
        %v1277 = vor.u32 %v1274, %v1275
        %v1278 = vsel %vm1187, %v1270, %v1277
        %v1280 = vshrl.u32 %v1179, 16
        %v1282 = vrot.slane %v1280, 7
        %v1283 = vrot.slane %v1282, 4
        %v1285 = vshrl.u32 %v1180, 16
        %v1287 = vrot.slane %v1285, 7
        %v1288 = vshll.u32 %v1180, 16
        %v1290 = vor.u32 %v1287, %v1288
        %v1291 = vsel %vm1187, %v1283, %v1290
        %v1293 = vshrl.u32 %v1181, 16
        %v1295 = vrot.slane %v1293, 7
        %v1296 = vrot.slane %v1295, 4
        %v1298 = vshrl.u32 %v1182, 16
        %v1300 = vrot.slane %v1298, 7
        %v1301 = vshll.u32 %v1182, 16
        %v1303 = vor.u32 %v1300, %v1301
        %v1304 = vsel %vm1187, %v1296, %v1303
        %v1306 = vshrl.u32 %v1183, 16
        %v1308 = vrot.slane %v1306, 7
        %v1309 = vrot.slane %v1308, 4
        %v1311 = vshrl.u32 %v1184, 16
        %v1313 = vrot.slane %v1311, 7
        %v1314 = vshll.u32 %v1184, 16
        %v1316 = vor.u32 %v1313, %v1314
        %v1317 = vsel %vm1187, %v1309, %v1316
        %v1318 = vld [vmem:[%s1] sm:$0xf]
        %v1319 = vld [vmem:[%s1 + $0x4] sm:$0xf]
        %v1320 = vld [vmem:[%s1 + $0x8] sm:$0xf]
        %v1321 = vld [vmem:[%s1 + $0xc] sm:$0xf]
        %v1322 = vld [vmem:[%s1 + $0x10] sm:$0x3]
        %v1323 = vunpack.c.l.b16 %v1200
        %v1324 = vunpack.c.l.b16 %v1213
        %v1325 = vunpack.c.l.b16 %v1226
        %v1326 = vunpack.c.l.b16 %v1239
        %v1327 = vunpack.c.l.b16 %v1252
        %v1328 = vunpack.c.l.b16 %v1265
        %v1329 = vunpack.c.l.b16 %v1278
        %v1330 = vunpack.c.l.b16 %v1291
        %v1331 = vunpack.c.l.b16 %v1304
        %v1332 = vunpack.c.l.b16 %v1317
        %v1333 = vpack.c.b16 %v1324, %v1323
        %v1334 = vpack.c.b16 %v1326, %v1325
        %v1335 = vpack.c.b16 %v1328, %v1327
        %v1336 = vpack.c.b16 %v1330, %v1329
        %v1337 = vpack.c.b16 %v1332, %v1331
        %v1343 = vunpack.c.l.b16 %v1318
        %v1344 = vunpack.c.l.b16 %v1319
        %v1345 = vunpack.c.l.b16 %v1320
        %v1346 = vunpack.c.l.b16 %v1321
        %v1347 = vunpack.c.l.b16 %v1322
        %v1348 = vpack.c.b16 %v1344, %v1343
        %v1349 = vpack.c.b16 %v1346, %v1345
        %v1350 = vpack.c.b16 %v1347, %v1347
        %vm1353 = vcmask 293888
        %v1355 = vsel %vm1353, %v1333, 0
        %v1358 = vsel %vm1353, %v1334, 0
        %v1361 = vsel %vm1353, %v1335, 0
        %v1364 = vsel %vm1353, %v1336, 0
        %v1367 = vsel %vm1353, %v1337, 0
        %vm1369 = vcmask 1041408
        %v1371 = vsel %vm1369, %v1350, 0
        %1373 = vmatpush.bf16.msra.mxu0 0
        %1374 = vmatpush.bf16.msra.mxu0 0
        %1375 = vmatpush.bf16.msra.mxu0 0
        %1376 = vmatpush.bf16.msra.mxu0 0
        %1377 = vmatpush.bf16.msra.mxu0 0
        %1378 = vmatpush.bf16.msra.mxu0 %v1371
        %1379 = vmatpush.bf16.msra.mxu0 %v1349
        %1380 = vmatpush.bf16.msra.mxu0 %v1348
        %1381 = vmatmul.bf16.gmra.mxu0 %v1355
        %v1382 = vpop.f32.mrf.mxu0
        %v1383 = vadd.f32 0.0, %v1382
        %v1384 = vpop.f32.mrf.mxu0
        %v1385 = vadd.f32 0.0, %v1384
        %1386 = vmatmul.bf16.gmra.mxu0 %v1358
        %v1387 = vpop.f32.mrf.mxu0
        %v1388 = vadd.f32 0.0, %v1387
        %v1389 = vpop.f32.mrf.mxu0
        %v1390 = vadd.f32 0.0, %v1389
        %1391 = vmatmul.bf16.gmra.mxu0 %v1361
        %v1392 = vpop.f32.mrf.mxu0
        %v1393 = vadd.f32 0.0, %v1392
        %v1394 = vpop.f32.mrf.mxu0
        %v1395 = vadd.f32 0.0, %v1394
        %1396 = vmatmul.bf16.gmra.mxu0 %v1364
        %v1397 = vpop.f32.mrf.mxu0
        %v1398 = vadd.f32 0.0, %v1397
        %v1399 = vpop.f32.mrf.mxu0
        %v1400 = vadd.f32 0.0, %v1399
        %1401 = vmatmul.bf16.gmra.mxu0 %v1367
        %v1402 = vpop.f32.mrf.mxu0
        %v1403 = vadd.f32 0.0, %v1402
        %v1404 = vpop.f32.mrf.mxu0
        %v1405 = vadd.f32 0.0, %v1404
        %1406 = vdwg.mxu0
        %v1407 = vld [vmem:[%s2] sm:$0x1]
        %v1409 = vperm.slane %v1407, 0
        %v1411 = vmul.f32 %v1383, %v1409
        %v1412 = vmul.f32 %v1385, %v1409
        %v1413 = vmul.f32 %v1388, %v1409
        %v1414 = vmul.f32 %v1390, %v1409
        %v1415 = vmul.f32 %v1393, %v1409
        %v1416 = vmul.f32 %v1395, %v1409
        %v1417 = vmul.f32 %v1398, %v1409
        %v1418 = vmul.f32 %v1400, %v1409
        %v1419 = vmul.f32 %v1403, %v1409
        %v1420 = vmul.f32 %v1405, %v1409
        %v1421 = vld [vmem:[%s3] sm:$0x1]
        %v1423 = vperm.slane %v1421, 0
        %v1425 = vadd.f32 %v1411, %v1423
        %v1426 = vadd.f32 %v1412, %v1423
        %v1427 = vadd.f32 %v1413, %v1423
        %v1428 = vadd.f32 %v1414, %v1423
        %v1429 = vadd.f32 %v1415, %v1423
        %v1430 = vadd.f32 %v1416, %v1423
        %v1431 = vadd.f32 %v1417, %v1423
        %v1432 = vadd.f32 %v1418, %v1423
        %v1433 = vadd.f32 %v1419, %v1423
        %v1434 = vadd.f32 %v1420, %v1423
        %v1435 = vmax.f32 %v1425, 0.0
        %v1436 = vmax.f32 %v1426, 0.0
        %v1437 = vmax.f32 %v1427, 0.0
        %v1438 = vmax.f32 %v1428, 0.0
        %v1439 = vmax.f32 %v1429, 0.0
        %v1440 = vmax.f32 %v1430, 0.0
        %v1441 = vmax.f32 %v1431, 0.0
        %v1442 = vmax.f32 %v1432, 0.0
        %v1443 = vmax.f32 %v1433, 0.0
        %v1444 = vmax.f32 %v1434, 0.0
        %v1445 = vpack.c.bf16 %v1435, %v1435
        %v1446 = vpack.c.bf16 %v1436, %v1436
        %v1447 = vpack.c.bf16 %v1437, %v1437
        %v1448 = vpack.c.bf16 %v1438, %v1438
        %v1449 = vpack.c.bf16 %v1439, %v1439
        %v1450 = vpack.c.bf16 %v1440, %v1440
        %v1451 = vpack.c.bf16 %v1441, %v1441
        %v1452 = vpack.c.bf16 %v1442, %v1442
        %v1453 = vpack.c.bf16 %v1443, %v1443
        %v1454 = vpack.c.bf16 %v1444, %v1444
        %1455 = vst [vmem:[#allocation3 + $0x4] sm:$0xf] %v1445
        %1456 = vst [vmem:[#allocation3 + $0x10] sm:$0xf] %v1446
        %1457 = vst [vmem:[#allocation3 + $0x1c] sm:$0xf] %v1447
        %1458 = vst [vmem:[#allocation3 + $0x28] sm:$0xf] %v1448
        %1459 = vst [vmem:[#allocation3 + $0x34] sm:$0xf] %v1449
        %1460 = vst [vmem:[#allocation3 + $0x40] sm:$0xf] %v1450
        %1461 = vst [vmem:[#allocation3 + $0x4c] sm:$0xf] %v1451
        %1462 = vst [vmem:[#allocation3 + $0x58] sm:$0xf] %v1452
        %1463 = vst [vmem:[#allocation3 + $0x64] sm:$0xf] %v1453
        %1464 = vst [vmem:[#allocation3 + $0x70] sm:$0xf] %v1454
        // Predicated region
        $region57: #{tpu_custom_call.1} parent=47 // pred_check
          %p1465 = pneg %p311
        $region58: #{tpu_custom_call.1} parent=47 // pred_check_branch
          %1467 = sbr.rel (%p1465) target = $region60
        $region59: #{tpu_custom_call.1} parent=47 // pred_region
          %1468 = vst [vmem:[#allocation3 + $0x4] sm:$0xf] 0
          %s1469 = scalar_lea.vmem [#allocation3], 108
          %1470 = vst [vmem:[%s1469 + $0x4] sm:$0xf] 0
        $region60: #{tpu_custom_call.1} parent=47 // pred_fallthru
          _
        %v1471 = vld [vmem:[#allocation3] sm:$0xf]
        %v1472 = vld [vmem:[#allocation3 + $0x4] sm:$0xf]
        %v1473 = vld [vmem:[#allocation3 + $0x8] sm:$0xf]
        %v1474 = vld [vmem:[#allocation3 + $0xc] sm:$0xf]
        %v1475 = vld [vmem:[#allocation3 + $0x10] sm:$0xf]
        %v1476 = vld [vmem:[#allocation3 + $0x14] sm:$0xf]
        %v1477 = vld [vmem:[#allocation3 + $0x18] sm:$0xf]
        %v1478 = vld [vmem:[#allocation3 + $0x1c] sm:$0xf]
        %v1479 = vld [vmem:[#allocation3 + $0x20] sm:$0xf]
        %v1480 = vld [vmem:[#allocation3 + $0x24] sm:$0xf]
        %v1481 = vld [vmem:[#allocation3 + $0x28] sm:$0xf]
        %v1482 = vld [vmem:[#allocation3 + $0x2c] sm:$0xf]
        %v1483 = vld [vmem:[#allocation3 + $0x30] sm:$0xf]
        %v1484 = vld [vmem:[#allocation3 + $0x34] sm:$0xf]
        %v1485 = vld [vmem:[#allocation3 + $0x38] sm:$0xf]
        %v1486 = vld [vmem:[#allocation3 + $0x3c] sm:$0xf]
        %v1487 = vld [vmem:[#allocation3 + $0x40] sm:$0xf]
        %v1488 = vld [vmem:[#allocation3 + $0x44] sm:$0xf]
        %v1489 = vld [vmem:[#allocation3 + $0x48] sm:$0xf]
        %v1490 = vld [vmem:[#allocation3 + $0x4c] sm:$0xf]
        %v1491 = vld [vmem:[#allocation3 + $0x50] sm:$0xf]
        %v1492 = vld [vmem:[#allocation3 + $0x54] sm:$0xf]
        %v1493 = vld [vmem:[#allocation3 + $0x58] sm:$0xf]
        %v1494 = vld [vmem:[#allocation3 + $0x5c] sm:$0xf]
        %v1495 = vld [vmem:[#allocation3 + $0x60] sm:$0xf]
        %v1496 = vld [vmem:[#allocation3 + $0x64] sm:$0xf]
        %v1497 = vld [vmem:[#allocation3 + $0x68] sm:$0xf]
        %v1498 = vld [vmem:[#allocation3 + $0x6c] sm:$0xf]
        %v1499 = vld [vmem:[#allocation3 + $0x70] sm:$0xf]
        %v1500 = vld [vmem:[#allocation3 + $0x74] sm:$0xf]
        %v1517 = vunpack.c.l.b16 %v1471
        %v1518 = vunpack.c.l.b16 %v1472
        %v1519 = vunpack.c.l.b16 %v1474
        %v1520 = vunpack.c.l.b16 %v1475
        %v1521 = vunpack.c.l.b16 %v1477
        %v1522 = vunpack.c.l.b16 %v1478
        %v1523 = vunpack.c.l.b16 %v1480
        %v1524 = vunpack.c.l.b16 %v1481
        %v1525 = vunpack.c.l.b16 %v1483
        %v1526 = vunpack.c.l.b16 %v1484
        %v1527 = vunpack.c.l.b16 %v1486
        %v1528 = vunpack.c.l.b16 %v1487
        %v1529 = vunpack.c.l.b16 %v1489
        %v1530 = vunpack.c.l.b16 %v1490
        %v1531 = vunpack.c.l.b16 %v1492
        %v1532 = vunpack.c.l.b16 %v1493
        %v1533 = vpack.c.b16 %v1518, %v1518
        %v1534 = vpack.c.b16 %v1520, %v1520
        %v1535 = vpack.c.b16 %v1522, %v1522
        %v1536 = vpack.c.b16 %v1524, %v1524
        %v1537 = vpack.c.b16 %v1526, %v1526
        %v1538 = vpack.c.b16 %v1528, %v1528
        %v1539 = vpack.c.b16 %v1530, %v1530
        %v1540 = vpack.c.b16 %v1532, %v1532
        %v1542 = vshrl.u32 %v1533, 16
        %v1544 = vrot.slane %v1542, 4
        %v1545 = vshll.u32 %v1533, 16
        %v1547 = vrot.slane %v1545, 5
        %v1548 = vor.u32 %v1544, %v1547
        %v1550 = vshrl.u32 %v1534, 16
        %v1552 = vrot.slane %v1550, 4
        %v1553 = vshll.u32 %v1534, 16
        %v1555 = vrot.slane %v1553, 5
        %v1556 = vor.u32 %v1552, %v1555
        %v1558 = vshrl.u32 %v1535, 16
        %v1560 = vrot.slane %v1558, 4
        %v1561 = vshll.u32 %v1535, 16
        %v1563 = vrot.slane %v1561, 5
        %v1564 = vor.u32 %v1560, %v1563
        %v1566 = vshrl.u32 %v1536, 16
        %v1568 = vrot.slane %v1566, 4
        %v1569 = vshll.u32 %v1536, 16
        %v1571 = vrot.slane %v1569, 5
        %v1572 = vor.u32 %v1568, %v1571
        %v1574 = vshrl.u32 %v1537, 16
        %v1576 = vrot.slane %v1574, 4
        %v1577 = vshll.u32 %v1537, 16
        %v1579 = vrot.slane %v1577, 5
        %v1580 = vor.u32 %v1576, %v1579
        %v1582 = vshrl.u32 %v1538, 16
        %v1584 = vrot.slane %v1582, 4
        %v1585 = vshll.u32 %v1538, 16
        %v1587 = vrot.slane %v1585, 5
        %v1588 = vor.u32 %v1584, %v1587
        %v1590 = vshrl.u32 %v1539, 16
        %v1592 = vrot.slane %v1590, 4
        %v1593 = vshll.u32 %v1539, 16
        %v1595 = vrot.slane %v1593, 5
        %v1596 = vor.u32 %v1592, %v1595
        %v1598 = vshrl.u32 %v1540, 16
        %v1600 = vrot.slane %v1598, 4
        %v1601 = vshll.u32 %v1540, 16
        %v1603 = vrot.slane %v1601, 5
        %v1604 = vor.u32 %v1600, %v1603
        %v1613 = vunpack.c.l.b16 %v1473
        %v1614 = vunpack.c.l.b16 %v1476
        %v1615 = vunpack.c.l.b16 %v1479
        %v1616 = vunpack.c.l.b16 %v1482
        %v1617 = vunpack.c.l.b16 %v1485
        %v1618 = vunpack.c.l.b16 %v1488
        %v1619 = vunpack.c.l.b16 %v1491
        %v1620 = vunpack.c.l.b16 %v1494
        %v1621 = vpack.c.b16 %v1613, %v1518
        %v1622 = vpack.c.b16 %v1614, %v1520
        %v1623 = vpack.c.b16 %v1615, %v1522
        %v1624 = vpack.c.b16 %v1616, %v1524
        %v1625 = vpack.c.b16 %v1617, %v1526
        %v1626 = vpack.c.b16 %v1618, %v1528
        %v1627 = vpack.c.b16 %v1619, %v1530
        %v1628 = vpack.c.b16 %v1620, %v1532
        %v1629 = vrot.slane %v1621, 5
        %v1630 = vrot.slane %v1622, 5
        %v1631 = vrot.slane %v1623, 5
        %v1632 = vrot.slane %v1624, 5
        %v1633 = vrot.slane %v1625, 5
        %v1634 = vrot.slane %v1626, 5
        %v1635 = vrot.slane %v1627, 5
        %v1636 = vrot.slane %v1628, 5
        %v1639 = vunpack.c.l.b16 %v1495
        %v1640 = vunpack.c.l.b16 %v1496
        %v1641 = vpack.c.b16 %v1640, %v1640
        %v1643 = vshrl.u32 %v1641, 16
        %v1645 = vrot.slane %v1643, 4
        %v1646 = vshll.u32 %v1641, 16
        %v1648 = vrot.slane %v1646, 5
        %v1649 = vor.u32 %v1645, %v1648
        %v1651 = vunpack.c.l.b16 %v1497
        %v1652 = vpack.c.b16 %v1651, %v1640
        %v1653 = vrot.slane %v1652, 5
        %v1656 = vunpack.c.l.b16 %v1498
        %v1657 = vunpack.c.l.b16 %v1499
        %v1658 = vpack.c.b16 %v1657, %v1657
        %v1660 = vshrl.u32 %v1658, 16
        %v1662 = vrot.slane %v1660, 4
        %v1663 = vshll.u32 %v1658, 16
        %v1665 = vrot.slane %v1663, 5
        %v1666 = vor.u32 %v1662, %v1665
        %v1668 = vunpack.c.l.b16 %v1500
        %v1669 = vpack.c.b16 %v1668, %v1657
        %v1670 = vrot.slane %v1669, 5
        %v1671 = vunpack.c.l.b16 %v1548
        %v1672 = vunpack.c.l.b16 %v1629
        %v1673 = vunpack.c.l.b16 %v1556
        %v1674 = vunpack.c.l.b16 %v1630
        %v1675 = vunpack.c.l.b16 %v1564
        %v1676 = vunpack.c.l.b16 %v1631
        %v1677 = vunpack.c.h.b16 %v1548
        %v1678 = vunpack.c.h.b16 %v1629
        %v1679 = vunpack.c.h.b16 %v1556
        %v1680 = vunpack.c.h.b16 %v1630
        %v1681 = vunpack.c.h.b16 %v1564
        %v1682 = vunpack.c.h.b16 %v1631
        %v1683 = vunpack.c.l.b16 %v1572
        %v1684 = vunpack.c.l.b16 %v1632
        %v1685 = vunpack.c.h.b16 %v1572
        %v1686 = vunpack.c.h.b16 %v1632
        %v1687 = vunpack.c.l.b16 %v1580
        %v1688 = vunpack.c.l.b16 %v1633
        %v1689 = vunpack.c.h.b16 %v1580
        %v1690 = vunpack.c.h.b16 %v1633
        %v1691 = vunpack.c.l.b16 %v1588
        %v1692 = vunpack.c.l.b16 %v1634
        %v1693 = vunpack.c.h.b16 %v1588
        %v1694 = vunpack.c.h.b16 %v1634
        %v1695 = vunpack.c.l.b16 %v1596
        %v1696 = vunpack.c.l.b16 %v1635
        %v1697 = vunpack.c.h.b16 %v1596
        %v1698 = vunpack.c.h.b16 %v1635
        %v1699 = vunpack.c.l.b16 %v1604
        %v1700 = vunpack.c.l.b16 %v1636
        %v1701 = vunpack.c.h.b16 %v1604
        %v1702 = vunpack.c.h.b16 %v1636
        %v1703 = vunpack.c.l.b16 %v1649
        %v1704 = vunpack.c.l.b16 %v1653
        %v1705 = vunpack.c.h.b16 %v1649
        %v1706 = vunpack.c.h.b16 %v1653
        %v1707 = vunpack.c.l.b16 %v1666
        %v1708 = vunpack.c.l.b16 %v1670
        %v1709 = vunpack.c.h.b16 %v1666
        %v1710 = vunpack.c.h.b16 %v1670
        %v1711 = vpack.c.b16 %v1671, %v1517
        %v1712 = vpack.c.b16 %v1519, %v1672
        %v1713 = vpack.c.b16 %v1674, %v1673
        %v1714 = vpack.c.b16 %v1675, %v1521
        %v1715 = vpack.c.b16 %v1676, %v1676
        %v1716 = vpack.c.b16 %v1677, %v1518
        %v1717 = vpack.c.b16 %v1520, %v1678
        %v1718 = vpack.c.b16 %v1680, %v1679
        %v1719 = vpack.c.b16 %v1681, %v1522
        %v1720 = vpack.c.b16 %v1682, %v1682
        %v1721 = vpack.c.b16 %v1673, %v1519
        %v1722 = vpack.c.b16 %v1521, %v1674
        %v1723 = vpack.c.b16 %v1676, %v1675
        %v1724 = vpack.c.b16 %v1683, %v1523
        %v1725 = vpack.c.b16 %v1684, %v1684
        %v1726 = vpack.c.b16 %v1679, %v1520
        %v1727 = vpack.c.b16 %v1522, %v1680
        %v1728 = vpack.c.b16 %v1682, %v1681
        %v1729 = vpack.c.b16 %v1685, %v1524
        %v1730 = vpack.c.b16 %v1686, %v1686
        %v1731 = vpack.c.b16 %v1523, %v1676
        %v1732 = vpack.c.b16 %v1684, %v1683
        %v1733 = vpack.c.b16 %v1687, %v1525
        %v1734 = vpack.c.b16 %v1688, %v1688
        %v1735 = vpack.c.b16 %v1524, %v1682
        %v1736 = vpack.c.b16 %v1686, %v1685
        %v1737 = vpack.c.b16 %v1689, %v1526
        %v1738 = vpack.c.b16 %v1690, %v1690
        %v1739 = vpack.c.b16 %v1525, %v1684
        %v1740 = vpack.c.b16 %v1688, %v1687
        %v1741 = vpack.c.b16 %v1691, %v1527
        %v1742 = vpack.c.b16 %v1692, %v1692
        %v1743 = vpack.c.b16 %v1526, %v1686
        %v1744 = vpack.c.b16 %v1690, %v1689
        %v1745 = vpack.c.b16 %v1693, %v1528
        %v1746 = vpack.c.b16 %v1694, %v1694
        %v1747 = vpack.c.b16 %v1527, %v1688
        %v1748 = vpack.c.b16 %v1692, %v1691
        %v1749 = vpack.c.b16 %v1695, %v1529
        %v1750 = vpack.c.b16 %v1696, %v1696
        %v1751 = vpack.c.b16 %v1528, %v1690
        %v1752 = vpack.c.b16 %v1694, %v1693
        %v1753 = vpack.c.b16 %v1697, %v1530
        %v1754 = vpack.c.b16 %v1698, %v1698
        %v1755 = vpack.c.b16 %v1529, %v1692
        %v1756 = vpack.c.b16 %v1696, %v1695
        %v1757 = vpack.c.b16 %v1699, %v1531
        %v1758 = vpack.c.b16 %v1700, %v1700
        %v1759 = vpack.c.b16 %v1530, %v1694
        %v1760 = vpack.c.b16 %v1698, %v1697
        %v1761 = vpack.c.b16 %v1701, %v1532
        %v1762 = vpack.c.b16 %v1702, %v1702
        %v1763 = vpack.c.b16 %v1531, %v1696
        %v1764 = vpack.c.b16 %v1700, %v1699
        %v1765 = vpack.c.b16 %v1703, %v1639
        %v1766 = vpack.c.b16 %v1704, %v1704
        %v1767 = vpack.c.b16 %v1532, %v1698
        %v1768 = vpack.c.b16 %v1702, %v1701
        %v1769 = vpack.c.b16 %v1705, %v1640
        %v1770 = vpack.c.b16 %v1706, %v1706
        %v1771 = vpack.c.b16 %v1639, %v1700
        %v1772 = vpack.c.b16 %v1704, %v1703
        %v1773 = vpack.c.b16 %v1707, %v1656
        %v1774 = vpack.c.b16 %v1708, %v1708
        %v1775 = vpack.c.b16 %v1640, %v1702
        %v1776 = vpack.c.b16 %v1706, %v1705
        %v1777 = vpack.c.b16 %v1709, %v1657
        %v1778 = vpack.c.b16 %v1710, %v1710
        %v1780 = vshrl.u32 %v1711, 16
        %v1782 = vrot.slane %v1780, 7
        %v1783 = vrot.slane %v1782, 4
        %v1785 = vshrl.u32 %v1716, 16
        %v1787 = vrot.slane %v1785, 7
        %v1788 = vshll.u32 %v1716, 16
        %v1790 = vor.u32 %v1787, %v1788
        %v1791 = vsel %vm1187, %v1783, %v1790
        %v1793 = vshrl.u32 %v1712, 16
        %v1795 = vrot.slane %v1793, 7
        %v1796 = vrot.slane %v1795, 4
        %v1798 = vshrl.u32 %v1717, 16
        %v1800 = vrot.slane %v1798, 7
        %v1801 = vshll.u32 %v1717, 16
        %v1803 = vor.u32 %v1800, %v1801
        %v1804 = vsel %vm1187, %v1796, %v1803
        %v1806 = vshrl.u32 %v1713, 16
        %v1808 = vrot.slane %v1806, 7
        %v1809 = vrot.slane %v1808, 4
        %v1811 = vshrl.u32 %v1718, 16
        %v1813 = vrot.slane %v1811, 7
        %v1814 = vshll.u32 %v1718, 16
        %v1816 = vor.u32 %v1813, %v1814
        %v1817 = vsel %vm1187, %v1809, %v1816
        %v1819 = vshrl.u32 %v1714, 16
        %v1821 = vrot.slane %v1819, 7
        %v1822 = vrot.slane %v1821, 4
        %v1824 = vshrl.u32 %v1719, 16
        %v1826 = vrot.slane %v1824, 7
        %v1827 = vshll.u32 %v1719, 16
        %v1829 = vor.u32 %v1826, %v1827
        %v1830 = vsel %vm1187, %v1822, %v1829
        %v1832 = vshrl.u32 %v1715, 16
        %v1834 = vrot.slane %v1832, 7
        %v1835 = vrot.slane %v1834, 4
        %v1837 = vshrl.u32 %v1720, 16
        %v1839 = vrot.slane %v1837, 7
        %v1840 = vshll.u32 %v1720, 16
        %v1842 = vor.u32 %v1839, %v1840
        %v1843 = vsel %vm1187, %v1835, %v1842
        %v1845 = vshrl.u32 %v1721, 16
        %v1847 = vrot.slane %v1845, 7
        %v1848 = vrot.slane %v1847, 4
        %v1850 = vshrl.u32 %v1726, 16
        %v1852 = vrot.slane %v1850, 7
        %v1853 = vshll.u32 %v1726, 16
        %v1855 = vor.u32 %v1852, %v1853
        %v1856 = vsel %vm1187, %v1848, %v1855
        %v1858 = vshrl.u32 %v1722, 16
        %v1860 = vrot.slane %v1858, 7
        %v1861 = vrot.slane %v1860, 4
        %v1863 = vshrl.u32 %v1727, 16
        %v1865 = vrot.slane %v1863, 7
        %v1866 = vshll.u32 %v1727, 16
        %v1868 = vor.u32 %v1865, %v1866
        %v1869 = vsel %vm1187, %v1861, %v1868
        %v1871 = vshrl.u32 %v1723, 16
        %v1873 = vrot.slane %v1871, 7
        %v1874 = vrot.slane %v1873, 4
        %v1876 = vshrl.u32 %v1728, 16
        %v1878 = vrot.slane %v1876, 7
        %v1879 = vshll.u32 %v1728, 16
        %v1881 = vor.u32 %v1878, %v1879
        %v1882 = vsel %vm1187, %v1874, %v1881
        %v1884 = vshrl.u32 %v1724, 16
        %v1886 = vrot.slane %v1884, 7
        %v1887 = vrot.slane %v1886, 4
        %v1889 = vshrl.u32 %v1729, 16
        %v1891 = vrot.slane %v1889, 7
        %v1892 = vshll.u32 %v1729, 16
        %v1894 = vor.u32 %v1891, %v1892
        %v1895 = vsel %vm1187, %v1887, %v1894
        %v1897 = vshrl.u32 %v1725, 16
        %v1899 = vrot.slane %v1897, 7
        %v1900 = vrot.slane %v1899, 4
        %v1902 = vshrl.u32 %v1730, 16
        %v1904 = vrot.slane %v1902, 7
        %v1905 = vshll.u32 %v1730, 16
        %v1907 = vor.u32 %v1904, %v1905
        %v1908 = vsel %vm1187, %v1900, %v1907
        %v1910 = vshrl.u32 %v1731, 16
        %v1912 = vrot.slane %v1910, 7
        %v1913 = vrot.slane %v1912, 4
        %v1915 = vshrl.u32 %v1735, 16
        %v1917 = vrot.slane %v1915, 7
        %v1918 = vshll.u32 %v1735, 16
        %v1920 = vor.u32 %v1917, %v1918
        %v1921 = vsel %vm1187, %v1913, %v1920
        %v1923 = vshrl.u32 %v1732, 16
        %v1925 = vrot.slane %v1923, 7
        %v1926 = vrot.slane %v1925, 4
        %v1928 = vshrl.u32 %v1736, 16
        %v1930 = vrot.slane %v1928, 7
        %v1931 = vshll.u32 %v1736, 16
        %v1933 = vor.u32 %v1930, %v1931
        %v1934 = vsel %vm1187, %v1926, %v1933
        %v1936 = vshrl.u32 %v1733, 16
        %v1938 = vrot.slane %v1936, 7
        %v1939 = vrot.slane %v1938, 4
        %v1941 = vshrl.u32 %v1737, 16
        %v1943 = vrot.slane %v1941, 7
        %v1944 = vshll.u32 %v1737, 16
        %v1946 = vor.u32 %v1943, %v1944
        %v1947 = vsel %vm1187, %v1939, %v1946
        %v1949 = vshrl.u32 %v1734, 16
        %v1951 = vrot.slane %v1949, 7
        %v1952 = vrot.slane %v1951, 4
        %v1954 = vshrl.u32 %v1738, 16
        %v1956 = vrot.slane %v1954, 7
        %v1957 = vshll.u32 %v1738, 16
        %v1959 = vor.u32 %v1956, %v1957
        %v1960 = vsel %vm1187, %v1952, %v1959
        %v1962 = vshrl.u32 %v1739, 16
        %v1964 = vrot.slane %v1962, 7
        %v1965 = vrot.slane %v1964, 4
        %v1967 = vshrl.u32 %v1743, 16
        %v1969 = vrot.slane %v1967, 7
        %v1970 = vshll.u32 %v1743, 16
        %v1972 = vor.u32 %v1969, %v1970
        %v1973 = vsel %vm1187, %v1965, %v1972
        %v1975 = vshrl.u32 %v1740, 16
        %v1977 = vrot.slane %v1975, 7
        %v1978 = vrot.slane %v1977, 4
        %v1980 = vshrl.u32 %v1744, 16
        %v1982 = vrot.slane %v1980, 7
        %v1983 = vshll.u32 %v1744, 16
        %v1985 = vor.u32 %v1982, %v1983
        %v1986 = vsel %vm1187, %v1978, %v1985
        %v1988 = vshrl.u32 %v1741, 16
        %v1990 = vrot.slane %v1988, 7
        %v1991 = vrot.slane %v1990, 4
        %v1993 = vshrl.u32 %v1745, 16
        %v1995 = vrot.slane %v1993, 7
        %v1996 = vshll.u32 %v1745, 16
        %v1998 = vor.u32 %v1995, %v1996
        %v1999 = vsel %vm1187, %v1991, %v1998
        %v2001 = vshrl.u32 %v1742, 16
        %v2003 = vrot.slane %v2001, 7
        %v2004 = vrot.slane %v2003, 4
        %v2006 = vshrl.u32 %v1746, 16
        %v2008 = vrot.slane %v2006, 7
        %v2009 = vshll.u32 %v1746, 16
        %v2011 = vor.u32 %v2008, %v2009
        %v2012 = vsel %vm1187, %v2004, %v2011
        %v2014 = vshrl.u32 %v1747, 16
        %v2016 = vrot.slane %v2014, 7
        %v2017 = vrot.slane %v2016, 4
        %v2019 = vshrl.u32 %v1751, 16
        %v2021 = vrot.slane %v2019, 7
        %v2022 = vshll.u32 %v1751, 16
        %v2024 = vor.u32 %v2021, %v2022
        %v2025 = vsel %vm1187, %v2017, %v2024
        %v2027 = vshrl.u32 %v1748, 16
        %v2029 = vrot.slane %v2027, 7
        %v2030 = vrot.slane %v2029, 4
        %v2032 = vshrl.u32 %v1752, 16
        %v2034 = vrot.slane %v2032, 7
        %v2035 = vshll.u32 %v1752, 16
        %v2037 = vor.u32 %v2034, %v2035
        %v2038 = vsel %vm1187, %v2030, %v2037
        %v2040 = vshrl.u32 %v1749, 16
        %v2042 = vrot.slane %v2040, 7
        %v2043 = vrot.slane %v2042, 4
        %v2045 = vshrl.u32 %v1753, 16
        %v2047 = vrot.slane %v2045, 7
        %v2048 = vshll.u32 %v1753, 16
        %v2050 = vor.u32 %v2047, %v2048
        %v2051 = vsel %vm1187, %v2043, %v2050
        %v2053 = vshrl.u32 %v1750, 16
        %v2055 = vrot.slane %v2053, 7
        %v2056 = vrot.slane %v2055, 4
        %v2058 = vshrl.u32 %v1754, 16
        %v2060 = vrot.slane %v2058, 7
        %v2061 = vshll.u32 %v1754, 16
        %v2063 = vor.u32 %v2060, %v2061
        %v2064 = vsel %vm1187, %v2056, %v2063
        %v2066 = vshrl.u32 %v1755, 16
        %v2068 = vrot.slane %v2066, 7
        %v2069 = vrot.slane %v2068, 4
        %v2071 = vshrl.u32 %v1759, 16
        %v2073 = vrot.slane %v2071, 7
        %v2074 = vshll.u32 %v1759, 16
        %v2076 = vor.u32 %v2073, %v2074
        %v2077 = vsel %vm1187, %v2069, %v2076
        %v2079 = vshrl.u32 %v1756, 16
        %v2081 = vrot.slane %v2079, 7
        %v2082 = vrot.slane %v2081, 4
        %v2084 = vshrl.u32 %v1760, 16
        %v2086 = vrot.slane %v2084, 7
        %v2087 = vshll.u32 %v1760, 16
        %v2089 = vor.u32 %v2086, %v2087
        %v2090 = vsel %vm1187, %v2082, %v2089
        %v2092 = vshrl.u32 %v1757, 16
        %v2094 = vrot.slane %v2092, 7
        %v2095 = vrot.slane %v2094, 4
        %v2097 = vshrl.u32 %v1761, 16
        %v2099 = vrot.slane %v2097, 7
        %v2100 = vshll.u32 %v1761, 16
        %v2102 = vor.u32 %v2099, %v2100
        %v2103 = vsel %vm1187, %v2095, %v2102
        %v2105 = vshrl.u32 %v1758, 16
        %v2107 = vrot.slane %v2105, 7
        %v2108 = vrot.slane %v2107, 4
        %v2110 = vshrl.u32 %v1762, 16
        %v2112 = vrot.slane %v2110, 7
        %v2113 = vshll.u32 %v1762, 16
        %v2115 = vor.u32 %v2112, %v2113
        %v2116 = vsel %vm1187, %v2108, %v2115
        %v2118 = vshrl.u32 %v1763, 16
        %v2120 = vrot.slane %v2118, 7
        %v2121 = vrot.slane %v2120, 4
        %v2123 = vshrl.u32 %v1767, 16
        %v2125 = vrot.slane %v2123, 7
        %v2126 = vshll.u32 %v1767, 16
        %v2128 = vor.u32 %v2125, %v2126
        %v2129 = vsel %vm1187, %v2121, %v2128
        %v2131 = vshrl.u32 %v1764, 16
        %v2133 = vrot.slane %v2131, 7
        %v2134 = vrot.slane %v2133, 4
        %v2136 = vshrl.u32 %v1768, 16
        %v2138 = vrot.slane %v2136, 7
        %v2139 = vshll.u32 %v1768, 16
        %v2141 = vor.u32 %v2138, %v2139
        %v2142 = vsel %vm1187, %v2134, %v2141
        %v2144 = vshrl.u32 %v1765, 16
        %v2146 = vrot.slane %v2144, 7
        %v2147 = vrot.slane %v2146, 4
        %v2149 = vshrl.u32 %v1769, 16
        %v2151 = vrot.slane %v2149, 7
        %v2152 = vshll.u32 %v1769, 16
        %v2154 = vor.u32 %v2151, %v2152
        %v2155 = vsel %vm1187, %v2147, %v2154
        %v2157 = vshrl.u32 %v1766, 16
        %v2159 = vrot.slane %v2157, 7
        %v2160 = vrot.slane %v2159, 4
        %v2162 = vshrl.u32 %v1770, 16
        %v2164 = vrot.slane %v2162, 7
        %v2165 = vshll.u32 %v1770, 16
        %v2167 = vor.u32 %v2164, %v2165
        %v2168 = vsel %vm1187, %v2160, %v2167
        %v2170 = vshrl.u32 %v1771, 16
        %v2172 = vrot.slane %v2170, 7
        %v2173 = vrot.slane %v2172, 4
        %v2175 = vshrl.u32 %v1775, 16
        %v2177 = vrot.slane %v2175, 7
        %v2178 = vshll.u32 %v1775, 16
        %v2180 = vor.u32 %v2177, %v2178
        %v2181 = vsel %vm1187, %v2173, %v2180
        %v2183 = vshrl.u32 %v1772, 16
        %v2185 = vrot.slane %v2183, 7
        %v2186 = vrot.slane %v2185, 4
        %v2188 = vshrl.u32 %v1776, 16
        %v2190 = vrot.slane %v2188, 7
        %v2191 = vshll.u32 %v1776, 16
        %v2193 = vor.u32 %v2190, %v2191
        %v2194 = vsel %vm1187, %v2186, %v2193
        %v2196 = vshrl.u32 %v1773, 16
        %v2198 = vrot.slane %v2196, 7
        %v2199 = vrot.slane %v2198, 4
        %v2201 = vshrl.u32 %v1777, 16
        %v2203 = vrot.slane %v2201, 7
        %v2204 = vshll.u32 %v1777, 16
        %v2206 = vor.u32 %v2203, %v2204
        %v2207 = vsel %vm1187, %v2199, %v2206
        %v2209 = vshrl.u32 %v1774, 16
        %v2211 = vrot.slane %v2209, 7
        %v2212 = vrot.slane %v2211, 4
        %v2214 = vshrl.u32 %v1778, 16
        %v2216 = vrot.slane %v2214, 7
        %v2217 = vshll.u32 %v1778, 16
        %v2219 = vor.u32 %v2216, %v2217
        %v2220 = vsel %vm1187, %v2212, %v2219
        %v2221 = vld [vmem:[#allocation4] sm:$0xf]
        %v2222 = vld [vmem:[#allocation4 + $0x4] sm:$0xf]
        %v2223 = vld [vmem:[#allocation4 + $0x8] sm:$0xf]
        %v2224 = vld [vmem:[#allocation4 + $0xc] sm:$0xf]
        %v2225 = vld [vmem:[#allocation4 + $0x10] sm:$0xf]
        %v2226 = vld [vmem:[#allocation4 + $0x14] sm:$0xf]
        %v2227 = vld [vmem:[#allocation4 + $0x18] sm:$0xf]
        %v2228 = vld [vmem:[#allocation4 + $0x1c] sm:$0xf]
        %v2229 = vld [vmem:[#allocation4 + $0x20] sm:$0xf]
        %v2230 = vld [vmem:[#allocation4 + $0x24] sm:$0xf]
        %v2231 = vld [vmem:[#allocation4 + $0x28] sm:$0xf]
        %v2232 = vld [vmem:[#allocation4 + $0x2c] sm:$0xf]
        %v2233 = vld [vmem:[#allocation4 + $0x30] sm:$0xf]
        %v2234 = vld [vmem:[#allocation4 + $0x34] sm:$0xf]
        %v2235 = vld [vmem:[#allocation4 + $0x38] sm:$0xf]
        %v2236 = vld [vmem:[#allocation4 + $0x3c] sm:$0xf]
        %v2237 = vld [vmem:[#allocation4 + $0x40] sm:$0xf]
        %v2238 = vld [vmem:[#allocation4 + $0x44] sm:$0xf]
        %v2239 = vld [vmem:[#allocation4 + $0x48] sm:$0xf]
        %v2240 = vld [vmem:[#allocation4 + $0x4c] sm:$0xf]
        %v2241 = vld [vmem:[#allocation4 + $0x50] sm:$0xf]
        %v2242 = vld [vmem:[#allocation4 + $0x54] sm:$0xf]
        %v2243 = vld [vmem:[#allocation4 + $0x58] sm:$0xf]
        %v2244 = vld [vmem:[#allocation4 + $0x5c] sm:$0xf]
        %v2245 = vld [vmem:[#allocation4 + $0x60] sm:$0xf]
        %v2246 = vld [vmem:[#allocation4 + $0x64] sm:$0xf]
        %v2247 = vld [vmem:[#allocation4 + $0x68] sm:$0xf]
        %v2248 = vld [vmem:[#allocation4 + $0x6c] sm:$0xf]
        %v2249 = vld [vmem:[#allocation4 + $0x70] sm:$0xf]
        %v2250 = vld [vmem:[#allocation4 + $0x74] sm:$0xf]
        %v2251 = vld [vmem:[#allocation4 + $0x78] sm:$0xf]
        %v2252 = vld [vmem:[#allocation4 + $0x7c] sm:$0xf]
        %v2253 = vld [vmem:[#allocation4 + $0x80] sm:$0xf]
        %v2254 = vld [vmem:[#allocation4 + $0x84] sm:$0xf]
        %v2255 = vld [vmem:[#allocation4 + $0x88] sm:$0xf]
        %v2256 = vld [vmem:[#allocation4 + $0x8c] sm:$0xf]
        %v2257 = vld [vmem:[#allocation4 + $0x90] sm:$0xf]
        %v2258 = vld [vmem:[#allocation4 + $0x94] sm:$0xf]
        %v2259 = vld [vmem:[#allocation4 + $0x98] sm:$0xf]
        %v2260 = vld [vmem:[#allocation4 + $0x9c] sm:$0xf]
        %v2261 = vld [vmem:[#allocation4 + $0xa0] sm:$0xf]
        %v2262 = vld [vmem:[#allocation4 + $0xa4] sm:$0xf]
        %v2263 = vld [vmem:[#allocation4 + $0xa8] sm:$0xf]
        %v2264 = vld [vmem:[#allocation4 + $0xac] sm:$0xf]
        %v2265 = vld [vmem:[#allocation4 + $0xb0] sm:$0xf]
        %v2266 = vld [vmem:[#allocation4 + $0xb4] sm:$0xf]
        %v2267 = vld [vmem:[#allocation4 + $0xb8] sm:$0xf]
        %v2268 = vld [vmem:[#allocation4 + $0xbc] sm:$0xf]
        %v2269 = vld [vmem:[#allocation4 + $0xc0] sm:$0xf]
        %v2270 = vld [vmem:[#allocation4 + $0xc4] sm:$0xf]
        %v2271 = vld [vmem:[#allocation4 + $0xc8] sm:$0xf]
        %v2272 = vld [vmem:[#allocation4 + $0xcc] sm:$0xf]
        %v2273 = vld [vmem:[#allocation4 + $0xd0] sm:$0xf]
        %v2274 = vld [vmem:[#allocation4 + $0xd4] sm:$0xf]
        %v2275 = vld [vmem:[#allocation4 + $0xd8] sm:$0xf]
        %v2276 = vld [vmem:[#allocation4 + $0xdc] sm:$0xf]
        %v2277 = vld [vmem:[#allocation4 + $0xe0] sm:$0xf]
        %v2278 = vld [vmem:[#allocation4 + $0xe4] sm:$0xf]
        %v2279 = vld [vmem:[#allocation4 + $0xe8] sm:$0xf]
        %v2280 = vld [vmem:[#allocation4 + $0xec] sm:$0xf]
        %v2281 = vld [vmem:[#allocation4 + $0xf0] sm:$0xf]
        %v2282 = vld [vmem:[#allocation4 + $0xf4] sm:$0xf]
        %v2283 = vld [vmem:[#allocation4 + $0xf8] sm:$0xf]
        %v2284 = vld [vmem:[#allocation4 + $0xfc] sm:$0xf]
        %v2285 = vld [vmem:[#allocation4 + $0x100] sm:$0xf]
        %v2286 = vld [vmem:[#allocation4 + $0x104] sm:$0xf]
        %v2287 = vld [vmem:[#allocation4 + $0x108] sm:$0xf]
        %v2288 = vld [vmem:[#allocation4 + $0x10c] sm:$0xf]
        %v2289 = vld [vmem:[#allocation4 + $0x110] sm:$0xf]
        %v2290 = vld [vmem:[#allocation4 + $0x114] sm:$0xf]
        %v2291 = vld [vmem:[#allocation4 + $0x118] sm:$0xf]
        %v2292 = vld [vmem:[#allocation4 + $0x11c] sm:$0xf]
        %v2293 = vld [vmem:[#allocation4 + $0x120] sm:$0xf]
        %v2294 = vld [vmem:[#allocation4 + $0x124] sm:$0xf]
        %v2295 = vld [vmem:[#allocation4 + $0x128] sm:$0xf]
        %v2296 = vld [vmem:[#allocation4 + $0x12c] sm:$0xf]
        %v2297 = vld [vmem:[#allocation4 + $0x130] sm:$0xf]
        %v2298 = vld [vmem:[#allocation4 + $0x134] sm:$0xf]
        %v2299 = vld [vmem:[#allocation4 + $0x138] sm:$0xf]
        %v2300 = vld [vmem:[#allocation4 + $0x13c] sm:$0xf]
        %v2301 = vld [vmem:[#allocation4 + $0x140] sm:$0xf]
        %v2302 = vld [vmem:[#allocation4 + $0x144] sm:$0xf]
        %v2303 = vld [vmem:[#allocation4 + $0x148] sm:$0xf]
        %v2304 = vld [vmem:[#allocation4 + $0x14c] sm:$0xf]
        %v2305 = vld [vmem:[#allocation4 + $0x150] sm:$0xf]
        %v2306 = vld [vmem:[#allocation4 + $0x154] sm:$0xf]
        %v2307 = vld [vmem:[#allocation4 + $0x158] sm:$0xf]
        %v2308 = vld [vmem:[#allocation4 + $0x15c] sm:$0xf]
        %v2309 = vld [vmem:[#allocation4 + $0x160] sm:$0xf]
        %v2310 = vld [vmem:[#allocation4 + $0x164] sm:$0xf]
        %v2311 = vld [vmem:[#allocation4 + $0x168] sm:$0xf]
        %v2312 = vld [vmem:[#allocation4 + $0x16c] sm:$0xf]
        %v2313 = vld [vmem:[#allocation4 + $0x170] sm:$0xf]
        %v2314 = vld [vmem:[#allocation4 + $0x174] sm:$0xf]
        %v2315 = vld [vmem:[#allocation4 + $0x178] sm:$0xf]
        %v2316 = vld [vmem:[#allocation4 + $0x17c] sm:$0xf]
        %v2317 = vld [vmem:[#allocation4 + $0x180] sm:$0xf]
        %v2318 = vld [vmem:[#allocation4 + $0x184] sm:$0xf]
        %v2319 = vld [vmem:[#allocation4 + $0x188] sm:$0xf]
        %v2320 = vld [vmem:[#allocation4 + $0x18c] sm:$0xf]
        %v2321 = vld [vmem:[#allocation4 + $0x190] sm:$0xf]
        %v2322 = vld [vmem:[#allocation4 + $0x194] sm:$0xf]
        %v2323 = vld [vmem:[#allocation4 + $0x198] sm:$0xf]
        %v2324 = vld [vmem:[#allocation4 + $0x19c] sm:$0xf]
        %v2325 = vld [vmem:[#allocation4 + $0x1a0] sm:$0xf]
        %v2326 = vld [vmem:[#allocation4 + $0x1a4] sm:$0xf]
        %v2327 = vld [vmem:[#allocation4 + $0x1a8] sm:$0xf]
        %v2328 = vld [vmem:[#allocation4 + $0x1ac] sm:$0xf]
        %v2329 = vld [vmem:[#allocation4 + $0x1b0] sm:$0xf]
        %v2330 = vld [vmem:[#allocation4 + $0x1b4] sm:$0xf]
        %v2331 = vld [vmem:[#allocation4 + $0x1b8] sm:$0xf]
        %v2332 = vld [vmem:[#allocation4 + $0x1bc] sm:$0xf]
        %v2333 = vld [vmem:[#allocation4 + $0x1c0] sm:$0xf]
        %v2334 = vld [vmem:[#allocation4 + $0x1c4] sm:$0xf]
        %v2335 = vld [vmem:[#allocation4 + $0x1c8] sm:$0xf]
        %v2336 = vld [vmem:[#allocation4 + $0x1cc] sm:$0xf]
        %v2337 = vld [vmem:[#allocation4 + $0x1d0] sm:$0xf]
        %v2338 = vld [vmem:[#allocation4 + $0x1d4] sm:$0xf]
        %v2339 = vld [vmem:[#allocation4 + $0x1d8] sm:$0xf]
        %v2340 = vld [vmem:[#allocation4 + $0x1dc] sm:$0xf]
        %v2341 = vld [vmem:[#allocation4 + $0x1e0] sm:$0xf]
        %v2342 = vld [vmem:[#allocation4 + $0x1e4] sm:$0xf]
        %v2343 = vld [vmem:[#allocation4 + $0x1e8] sm:$0xf]
        %v2344 = vld [vmem:[#allocation4 + $0x1ec] sm:$0xf]
        %v2345 = vld [vmem:[#allocation4 + $0x1f0] sm:$0xf]
        %v2346 = vld [vmem:[#allocation4 + $0x1f4] sm:$0xf]
        %v2347 = vld [vmem:[#allocation4 + $0x1f8] sm:$0xf]
        %v2348 = vld [vmem:[#allocation4 + $0x1fc] sm:$0xf]
        %v2349 = vld [vmem:[#allocation4 + $0x200] sm:$0xf]
        %v2350 = vld [vmem:[#allocation4 + $0x204] sm:$0xf]
        %v2351 = vld [vmem:[#allocation4 + $0x208] sm:$0xf]
        %v2352 = vld [vmem:[#allocation4 + $0x20c] sm:$0xf]
        %v2353 = vld [vmem:[#allocation4 + $0x210] sm:$0xf]
        %v2354 = vld [vmem:[#allocation4 + $0x214] sm:$0xf]
        %v2355 = vld [vmem:[#allocation4 + $0x218] sm:$0xf]
        %v2356 = vld [vmem:[#allocation4 + $0x21c] sm:$0xf]
        %v2357 = vld [vmem:[#allocation4 + $0x220] sm:$0xf]
        %v2358 = vld [vmem:[#allocation4 + $0x224] sm:$0xf]
        %v2359 = vld [vmem:[#allocation4 + $0x228] sm:$0xf]
        %v2360 = vld [vmem:[#allocation4 + $0x22c] sm:$0xf]
        %v2361 = vld [vmem:[#allocation4 + $0x230] sm:$0xf]
        %v2362 = vld [vmem:[#allocation4 + $0x234] sm:$0xf]
        %v2363 = vld [vmem:[#allocation4 + $0x238] sm:$0xf]
        %v2364 = vld [vmem:[#allocation4 + $0x23c] sm:$0xf]
        %v2365 = vunpack.c.l.b16 %v1791
        %v2366 = vunpack.c.h.b16 %v1791
        %v2367 = vunpack.c.l.b16 %v1804
        %v2368 = vunpack.c.h.b16 %v1804
        %v2369 = vunpack.c.l.b16 %v1817
        %v2370 = vunpack.c.h.b16 %v1817
        %v2371 = vunpack.c.l.b16 %v1830
        %v2372 = vunpack.c.h.b16 %v1830
        %v2373 = vunpack.c.l.b16 %v1843
        %v2374 = vunpack.c.l.b16 %v1856
        %v2375 = vunpack.c.h.b16 %v1856
        %v2376 = vunpack.c.l.b16 %v1869
        %v2377 = vunpack.c.h.b16 %v1869
        %v2378 = vunpack.c.l.b16 %v1882
        %v2379 = vunpack.c.h.b16 %v1882
        %v2380 = vunpack.c.l.b16 %v1895
        %v2381 = vunpack.c.h.b16 %v1895
        %v2382 = vunpack.c.l.b16 %v1908
        %v2383 = vunpack.c.l.b16 %v1921
        %v2384 = vunpack.c.h.b16 %v1921
        %v2385 = vunpack.c.l.b16 %v1934
        %v2386 = vunpack.c.h.b16 %v1934
        %v2387 = vunpack.c.l.b16 %v1947
        %v2388 = vunpack.c.h.b16 %v1947
        %v2389 = vunpack.c.l.b16 %v1960
        %v2390 = vunpack.c.l.b16 %v1973
        %v2391 = vunpack.c.h.b16 %v1973
        %v2392 = vunpack.c.l.b16 %v1986
        %v2393 = vunpack.c.h.b16 %v1986
        %v2394 = vunpack.c.l.b16 %v1999
        %v2395 = vunpack.c.h.b16 %v1999
        %v2396 = vunpack.c.l.b16 %v2012
        %v2397 = vunpack.c.l.b16 %v2025
        %v2398 = vunpack.c.h.b16 %v2025
        %v2399 = vunpack.c.l.b16 %v2038
        %v2400 = vunpack.c.h.b16 %v2038
        %v2401 = vunpack.c.l.b16 %v2051
        %v2402 = vunpack.c.h.b16 %v2051
        %v2403 = vunpack.c.l.b16 %v2064
        %v2404 = vunpack.c.l.b16 %v2077
        %v2405 = vunpack.c.h.b16 %v2077
        %v2406 = vunpack.c.l.b16 %v2090
        %v2407 = vunpack.c.h.b16 %v2090
        %v2408 = vunpack.c.l.b16 %v2103
        %v2409 = vunpack.c.h.b16 %v2103
        %v2410 = vunpack.c.l.b16 %v2116
        %v2411 = vunpack.c.l.b16 %v2129
        %v2412 = vunpack.c.h.b16 %v2129
        %v2413 = vunpack.c.l.b16 %v2142
        %v2414 = vunpack.c.h.b16 %v2142
        %v2415 = vunpack.c.l.b16 %v2155
        %v2416 = vunpack.c.h.b16 %v2155
        %v2417 = vunpack.c.l.b16 %v2168
        %v2418 = vunpack.c.l.b16 %v2181
        %v2419 = vunpack.c.h.b16 %v2181
        %v2420 = vunpack.c.l.b16 %v2194
        %v2421 = vunpack.c.h.b16 %v2194
        %v2422 = vunpack.c.l.b16 %v2207
        %v2423 = vunpack.c.h.b16 %v2207
        %v2424 = vunpack.c.l.b16 %v2220
        %v2425 = vpack.c.b16 %v2374, %v2365
        %v2426 = vpack.c.b16 %v2375, %v2366
        %v2427 = vpack.c.b16 %v2376, %v2367
        %v2428 = vpack.c.b16 %v2377, %v2368
        %v2429 = vpack.c.b16 %v2378, %v2369
        %v2430 = vpack.c.b16 %v2379, %v2370
        %v2431 = vpack.c.b16 %v2380, %v2371
        %v2432 = vpack.c.b16 %v2381, %v2372
        %v2433 = vpack.c.b16 %v2382, %v2373
        %v2434 = vpack.c.b16 %v2390, %v2383
        %v2435 = vpack.c.b16 %v2391, %v2384
        %v2436 = vpack.c.b16 %v2392, %v2385
        %v2437 = vpack.c.b16 %v2393, %v2386
        %v2438 = vpack.c.b16 %v2394, %v2387
        %v2439 = vpack.c.b16 %v2395, %v2388
        %v2440 = vpack.c.b16 %v2396, %v2389
        %v2441 = vpack.c.b16 %v2404, %v2397
        %v2442 = vpack.c.b16 %v2405, %v2398
        %v2443 = vpack.c.b16 %v2406, %v2399
        %v2444 = vpack.c.b16 %v2407, %v2400
        %v2445 = vpack.c.b16 %v2408, %v2401
        %v2446 = vpack.c.b16 %v2409, %v2402
        %v2447 = vpack.c.b16 %v2410, %v2403
        %v2448 = vpack.c.b16 %v2418, %v2411
        %v2449 = vpack.c.b16 %v2419, %v2412
        %v2450 = vpack.c.b16 %v2420, %v2413
        %v2451 = vpack.c.b16 %v2421, %v2414
        %v2452 = vpack.c.b16 %v2422, %v2415
        %v2453 = vpack.c.b16 %v2423, %v2416
        %v2454 = vpack.c.b16 %v2424, %v2417
        %v2629 = vunpack.c.l.b16 %v2221
        %v2630 = vunpack.c.l.b16 %v2222
        %v2631 = vunpack.c.l.b16 %v2223
        %v2632 = vunpack.c.l.b16 %v2224
        %v2633 = vunpack.c.l.b16 %v2225
        %v2634 = vunpack.c.l.b16 %v2226
        %v2635 = vunpack.c.l.b16 %v2227
        %v2636 = vunpack.c.l.b16 %v2228
        %v2637 = vunpack.c.l.b16 %v2229
        %v2638 = vunpack.c.l.b16 %v2230
        %v2639 = vunpack.c.l.b16 %v2231
        %v2640 = vunpack.c.l.b16 %v2232
        %v2641 = vunpack.c.l.b16 %v2233
        %v2642 = vunpack.c.l.b16 %v2234
        %v2643 = vunpack.c.l.b16 %v2235
        %v2644 = vunpack.c.l.b16 %v2236
        %v2645 = vunpack.c.l.b16 %v2237
        %v2646 = vunpack.c.l.b16 %v2238
        %v2647 = vunpack.c.l.b16 %v2239
        %v2648 = vunpack.c.l.b16 %v2240
        %v2649 = vunpack.c.l.b16 %v2241
        %v2650 = vunpack.c.l.b16 %v2242
        %v2651 = vunpack.c.l.b16 %v2243
        %v2652 = vunpack.c.l.b16 %v2244
        %v2653 = vunpack.c.l.b16 %v2245
        %v2654 = vunpack.c.l.b16 %v2246
        %v2655 = vunpack.c.l.b16 %v2247
        %v2656 = vunpack.c.l.b16 %v2248
        %v2657 = vunpack.c.l.b16 %v2249
        %v2658 = vunpack.c.l.b16 %v2250
        %v2659 = vunpack.c.l.b16 %v2251
        %v2660 = vunpack.c.l.b16 %v2252
        %v2661 = vunpack.c.l.b16 %v2253
        %v2662 = vunpack.c.l.b16 %v2254
        %v2663 = vunpack.c.l.b16 %v2255
        %v2664 = vunpack.c.l.b16 %v2256
        %v2665 = vunpack.c.l.b16 %v2257
        %v2666 = vunpack.c.l.b16 %v2258
        %v2667 = vunpack.c.l.b16 %v2259
        %v2668 = vunpack.c.l.b16 %v2260
        %v2669 = vunpack.c.l.b16 %v2261
        %v2670 = vunpack.c.l.b16 %v2262
        %v2671 = vunpack.c.l.b16 %v2263
        %v2672 = vunpack.c.l.b16 %v2264
        %v2673 = vunpack.c.l.b16 %v2265
        %v2674 = vunpack.c.l.b16 %v2266
        %v2675 = vunpack.c.l.b16 %v2267
        %v2676 = vunpack.c.l.b16 %v2268
        %v2677 = vunpack.c.l.b16 %v2269
        %v2678 = vunpack.c.l.b16 %v2270
        %v2679 = vunpack.c.l.b16 %v2271
        %v2680 = vunpack.c.l.b16 %v2272
        %v2681 = vunpack.c.l.b16 %v2273
        %v2682 = vunpack.c.l.b16 %v2274
        %v2683 = vunpack.c.l.b16 %v2275
        %v2684 = vunpack.c.l.b16 %v2276
        %v2685 = vunpack.c.l.b16 %v2277
        %v2686 = vunpack.c.l.b16 %v2278
        %v2687 = vunpack.c.l.b16 %v2279
        %v2688 = vunpack.c.l.b16 %v2280
        %v2689 = vunpack.c.l.b16 %v2281
        %v2690 = vunpack.c.l.b16 %v2282
        %v2691 = vunpack.c.l.b16 %v2283
        %v2692 = vunpack.c.l.b16 %v2284
        %v2693 = vunpack.c.l.b16 %v2285
        %v2694 = vunpack.c.l.b16 %v2286
        %v2695 = vunpack.c.l.b16 %v2287
        %v2696 = vunpack.c.l.b16 %v2288
        %v2697 = vunpack.c.l.b16 %v2289
        %v2698 = vunpack.c.l.b16 %v2290
        %v2699 = vunpack.c.l.b16 %v2291
        %v2700 = vunpack.c.l.b16 %v2292
        %v2701 = vunpack.c.l.b16 %v2293
        %v2702 = vunpack.c.l.b16 %v2294
        %v2703 = vunpack.c.l.b16 %v2295
        %v2704 = vunpack.c.l.b16 %v2296
        %v2705 = vunpack.c.l.b16 %v2297
        %v2706 = vunpack.c.l.b16 %v2298
        %v2707 = vunpack.c.l.b16 %v2299
        %v2708 = vunpack.c.l.b16 %v2300
        %v2709 = vunpack.c.l.b16 %v2301
        %v2710 = vunpack.c.l.b16 %v2302
        %v2711 = vunpack.c.l.b16 %v2303
        %v2712 = vunpack.c.l.b16 %v2304
        %v2713 = vunpack.c.l.b16 %v2305
        %v2714 = vunpack.c.l.b16 %v2306
        %v2715 = vunpack.c.l.b16 %v2307
        %v2716 = vunpack.c.l.b16 %v2308
        %v2717 = vunpack.c.l.b16 %v2309
        %v2718 = vunpack.c.l.b16 %v2310
        %v2719 = vunpack.c.l.b16 %v2311
        %v2720 = vunpack.c.l.b16 %v2312
        %v2721 = vunpack.c.l.b16 %v2313
        %v2722 = vunpack.c.l.b16 %v2314
        %v2723 = vunpack.c.l.b16 %v2315
        %v2724 = vunpack.c.l.b16 %v2316
        %v2725 = vunpack.c.l.b16 %v2317
        %v2726 = vunpack.c.l.b16 %v2318
        %v2727 = vunpack.c.l.b16 %v2319
        %v2728 = vunpack.c.l.b16 %v2320
        %v2729 = vunpack.c.l.b16 %v2321
        %v2730 = vunpack.c.l.b16 %v2322
        %v2731 = vunpack.c.l.b16 %v2323
        %v2732 = vunpack.c.l.b16 %v2324
        %v2733 = vunpack.c.l.b16 %v2325
        %v2734 = vunpack.c.l.b16 %v2326
        %v2735 = vunpack.c.l.b16 %v2327
        %v2736 = vunpack.c.l.b16 %v2328
        %v2737 = vunpack.c.l.b16 %v2329
        %v2738 = vunpack.c.l.b16 %v2330
        %v2739 = vunpack.c.l.b16 %v2331
        %v2740 = vunpack.c.l.b16 %v2332
        %v2741 = vunpack.c.l.b16 %v2333
        %v2742 = vunpack.c.l.b16 %v2334
        %v2743 = vunpack.c.l.b16 %v2335
        %v2744 = vunpack.c.l.b16 %v2336
        %v2745 = vunpack.c.l.b16 %v2337
        %v2746 = vunpack.c.l.b16 %v2338
        %v2747 = vunpack.c.l.b16 %v2339
        %v2748 = vunpack.c.l.b16 %v2340
        %v2749 = vunpack.c.l.b16 %v2341
        %v2750 = vunpack.c.l.b16 %v2342
        %v2751 = vunpack.c.l.b16 %v2343
        %v2752 = vunpack.c.l.b16 %v2344
        %v2753 = vunpack.c.l.b16 %v2345
        %v2754 = vunpack.c.l.b16 %v2346
        %v2755 = vunpack.c.l.b16 %v2347
        %v2756 = vunpack.c.l.b16 %v2348
        %v2757 = vunpack.c.l.b16 %v2349
        %v2758 = vunpack.c.l.b16 %v2350
        %v2759 = vunpack.c.l.b16 %v2351
        %v2760 = vunpack.c.l.b16 %v2352
        %v2761 = vunpack.c.l.b16 %v2353
        %v2762 = vunpack.c.l.b16 %v2354
        %v2763 = vunpack.c.l.b16 %v2355
        %v2764 = vunpack.c.l.b16 %v2356
        %v2765 = vunpack.c.l.b16 %v2357
        %v2766 = vunpack.c.l.b16 %v2358
        %v2767 = vunpack.c.l.b16 %v2359
        %v2768 = vunpack.c.l.b16 %v2360
        %v2769 = vunpack.c.l.b16 %v2361
        %v2770 = vunpack.c.l.b16 %v2362
        %v2771 = vunpack.c.l.b16 %v2363
        %v2772 = vunpack.c.l.b16 %v2364
        %v2773 = vpack.c.b16 %v2630, %v2629
        %v2774 = vpack.c.b16 %v2632, %v2631
        %v2775 = vpack.c.b16 %v2634, %v2633
        %v2776 = vpack.c.b16 %v2636, %v2635
        %v2777 = vpack.c.b16 %v2638, %v2637
        %v2778 = vpack.c.b16 %v2640, %v2639
        %v2779 = vpack.c.b16 %v2642, %v2641
        %v2780 = vpack.c.b16 %v2644, %v2643
        %v2781 = vpack.c.b16 %v2646, %v2645
        %v2782 = vpack.c.b16 %v2648, %v2647
        %v2783 = vpack.c.b16 %v2650, %v2649
        %v2784 = vpack.c.b16 %v2652, %v2651
        %v2785 = vpack.c.b16 %v2654, %v2653
        %v2786 = vpack.c.b16 %v2656, %v2655
        %v2787 = vpack.c.b16 %v2658, %v2657
        %v2788 = vpack.c.b16 %v2660, %v2659
        %v2789 = vpack.c.b16 %v2662, %v2661
        %v2790 = vpack.c.b16 %v2664, %v2663
        %v2791 = vpack.c.b16 %v2666, %v2665
        %v2792 = vpack.c.b16 %v2668, %v2667
        %v2793 = vpack.c.b16 %v2670, %v2669
        %v2794 = vpack.c.b16 %v2672, %v2671
        %v2795 = vpack.c.b16 %v2674, %v2673
        %v2796 = vpack.c.b16 %v2676, %v2675
        %v2797 = vpack.c.b16 %v2678, %v2677
        %v2798 = vpack.c.b16 %v2680, %v2679
        %v2799 = vpack.c.b16 %v2682, %v2681
        %v2800 = vpack.c.b16 %v2684, %v2683
        %v2801 = vpack.c.b16 %v2686, %v2685
        %v2802 = vpack.c.b16 %v2688, %v2687
        %v2803 = vpack.c.b16 %v2690, %v2689
        %v2804 = vpack.c.b16 %v2692, %v2691
        %v2805 = vpack.c.b16 %v2694, %v2693
        %v2806 = vpack.c.b16 %v2696, %v2695
        %v2807 = vpack.c.b16 %v2698, %v2697
        %v2808 = vpack.c.b16 %v2700, %v2699
        %v2809 = vpack.c.b16 %v2702, %v2701
        %v2810 = vpack.c.b16 %v2704, %v2703
        %v2811 = vpack.c.b16 %v2706, %v2705
        %v2812 = vpack.c.b16 %v2708, %v2707
        %v2813 = vpack.c.b16 %v2710, %v2709
        %v2814 = vpack.c.b16 %v2712, %v2711
        %v2815 = vpack.c.b16 %v2714, %v2713
        %v2816 = vpack.c.b16 %v2716, %v2715
        %v2817 = vpack.c.b16 %v2718, %v2717
        %v2818 = vpack.c.b16 %v2720, %v2719
        %v2819 = vpack.c.b16 %v2722, %v2721
        %v2820 = vpack.c.b16 %v2724, %v2723
        %v2821 = vpack.c.b16 %v2726, %v2725
        %v2822 = vpack.c.b16 %v2728, %v2727
        %v2823 = vpack.c.b16 %v2730, %v2729
        %v2824 = vpack.c.b16 %v2732, %v2731
        %v2825 = vpack.c.b16 %v2734, %v2733
        %v2826 = vpack.c.b16 %v2736, %v2735
        %v2827 = vpack.c.b16 %v2738, %v2737
        %v2828 = vpack.c.b16 %v2740, %v2739
        %v2829 = vpack.c.b16 %v2742, %v2741
        %v2830 = vpack.c.b16 %v2744, %v2743
        %v2831 = vpack.c.b16 %v2746, %v2745
        %v2832 = vpack.c.b16 %v2748, %v2747
        %v2833 = vpack.c.b16 %v2750, %v2749
        %v2834 = vpack.c.b16 %v2752, %v2751
        %v2835 = vpack.c.b16 %v2754, %v2753
        %v2836 = vpack.c.b16 %v2756, %v2755
        %v2837 = vpack.c.b16 %v2758, %v2757
        %v2838 = vpack.c.b16 %v2760, %v2759
        %v2839 = vpack.c.b16 %v2762, %v2761
        %v2840 = vpack.c.b16 %v2764, %v2763
        %v2841 = vpack.c.b16 %v2766, %v2765
        %v2842 = vpack.c.b16 %v2768, %v2767
        %v2843 = vpack.c.b16 %v2770, %v2769
        %v2844 = vpack.c.b16 %v2772, %v2771
        %2917 = vmatpush.bf16.msra.mxu0 %v2780
        %2918 = vmatpush.bf16.msra.mxu0 %v2779
        %2919 = vmatpush.bf16.msra.mxu0 %v2778
        %2920 = vmatpush.bf16.msra.mxu0 %v2777
        %2921 = vmatpush.bf16.msra.mxu0 %v2776
        %2922 = vmatpush.bf16.msra.mxu0 %v2775
        %2923 = vmatpush.bf16.msra.mxu0 %v2774
        %2924 = vmatpush.bf16.msra.mxu0 %v2773
        %2925 = vmatmul.bf16.gmra.mxu0 %v2425
        %v2926 = vpop.f32.mrf.mxu0
        %v2927 = vadd.f32 0.0, %v2926
        %v2928 = vpop.f32.mrf.mxu0
        %v2929 = vadd.f32 0.0, %v2928
        %2930 = vmatmul.bf16.gmra.mxu0 %v2431
        %v2931 = vpop.f32.mrf.mxu0
        %v2932 = vadd.f32 0.0, %v2931
        %v2933 = vpop.f32.mrf.mxu0
        %v2934 = vadd.f32 0.0, %v2933
        %2935 = vmatmul.bf16.gmra.mxu0 %v2438
        %v2936 = vpop.f32.mrf.mxu0
        %v2937 = vadd.f32 0.0, %v2936
        %v2938 = vpop.f32.mrf.mxu0
        %v2939 = vadd.f32 0.0, %v2938
        %2940 = vmatmul.bf16.gmra.mxu0 %v2445
        %v2941 = vpop.f32.mrf.mxu0
        %v2942 = vadd.f32 0.0, %v2941
        %v2943 = vpop.f32.mrf.mxu0
        %v2944 = vadd.f32 0.0, %v2943
        %2945 = vdwg.mxu0
        %2946 = vmatpush.bf16.msra.mxu0 %v2788
        %2947 = vmatpush.bf16.msra.mxu0 %v2787
        %2948 = vmatpush.bf16.msra.mxu0 %v2786
        %2949 = vmatpush.bf16.msra.mxu0 %v2785
        %2950 = vmatpush.bf16.msra.mxu0 %v2784
        %2951 = vmatpush.bf16.msra.mxu0 %v2783
        %2952 = vmatpush.bf16.msra.mxu0 %v2782
        %2953 = vmatpush.bf16.msra.mxu0 %v2781
        %2954 = vmatmul.bf16.gmra.mxu0 %v2426
        %v2955 = vpop.f32.mrf.mxu0
        %v2956 = vadd.f32 %v2927, %v2955
        %v2957 = vpop.f32.mrf.mxu0
        %v2958 = vadd.f32 %v2929, %v2957
        %2959 = vmatmul.bf16.gmra.mxu0 %v2432
        %v2960 = vpop.f32.mrf.mxu0
        %v2961 = vadd.f32 %v2932, %v2960
        %v2962 = vpop.f32.mrf.mxu0
        %v2963 = vadd.f32 %v2934, %v2962
        %2964 = vmatmul.bf16.gmra.mxu0 %v2439
        %v2965 = vpop.f32.mrf.mxu0
        %v2966 = vadd.f32 %v2937, %v2965
        %v2967 = vpop.f32.mrf.mxu0
        %v2968 = vadd.f32 %v2939, %v2967
        %2969 = vmatmul.bf16.gmra.mxu0 %v2446
        %v2970 = vpop.f32.mrf.mxu0
        %v2971 = vadd.f32 %v2942, %v2970
        %v2972 = vpop.f32.mrf.mxu0
        %v2973 = vadd.f32 %v2944, %v2972
        %2974 = vdwg.mxu0
        %2975 = vmatpush.bf16.msra.mxu0 %v2796
        %2976 = vmatpush.bf16.msra.mxu0 %v2795
        %2977 = vmatpush.bf16.msra.mxu0 %v2794
        %2978 = vmatpush.bf16.msra.mxu0 %v2793
        %2979 = vmatpush.bf16.msra.mxu0 %v2792
        %2980 = vmatpush.bf16.msra.mxu0 %v2791
        %2981 = vmatpush.bf16.msra.mxu0 %v2790
        %2982 = vmatpush.bf16.msra.mxu0 %v2789
        %2983 = vmatmul.bf16.gmra.mxu0 %v2427
        %v2984 = vpop.f32.mrf.mxu0
        %v2985 = vadd.f32 %v2956, %v2984
        %v2986 = vpop.f32.mrf.mxu0
        %v2987 = vadd.f32 %v2958, %v2986
        %2988 = vmatmul.bf16.gmra.mxu0 %v2434
        %v2989 = vpop.f32.mrf.mxu0
        %v2990 = vadd.f32 %v2961, %v2989
        %v2991 = vpop.f32.mrf.mxu0
        %v2992 = vadd.f32 %v2963, %v2991
        %2993 = vmatmul.bf16.gmra.mxu0 %v2441
        %v2994 = vpop.f32.mrf.mxu0
        %v2995 = vadd.f32 %v2966, %v2994
        %v2996 = vpop.f32.mrf.mxu0
        %v2997 = vadd.f32 %v2968, %v2996
        %2998 = vmatmul.bf16.gmra.mxu0 %v2448
        %v2999 = vpop.f32.mrf.mxu0
        %v3000 = vadd.f32 %v2971, %v2999
        %v3001 = vpop.f32.mrf.mxu0
        %v3002 = vadd.f32 %v2973, %v3001
        %3003 = vdwg.mxu0
        %3004 = vmatpush.bf16.msra.mxu0 %v2804
        %3005 = vmatpush.bf16.msra.mxu0 %v2803
        %3006 = vmatpush.bf16.msra.mxu0 %v2802
        %3007 = vmatpush.bf16.msra.mxu0 %v2801
        %3008 = vmatpush.bf16.msra.mxu0 %v2800
        %3009 = vmatpush.bf16.msra.mxu0 %v2799
        %3010 = vmatpush.bf16.msra.mxu0 %v2798
        %3011 = vmatpush.bf16.msra.mxu0 %v2797
        %3012 = vmatmul.bf16.gmra.mxu0 %v2428
        %v3013 = vpop.f32.mrf.mxu0
        %v3014 = vadd.f32 %v2985, %v3013
        %v3015 = vpop.f32.mrf.mxu0
        %v3016 = vadd.f32 %v2987, %v3015
        %3017 = vmatmul.bf16.gmra.mxu0 %v2435
        %v3018 = vpop.f32.mrf.mxu0
        %v3019 = vadd.f32 %v2990, %v3018
        %v3020 = vpop.f32.mrf.mxu0
        %v3021 = vadd.f32 %v2992, %v3020
        %3022 = vmatmul.bf16.gmra.mxu0 %v2442
        %v3023 = vpop.f32.mrf.mxu0
        %v3024 = vadd.f32 %v2995, %v3023
        %v3025 = vpop.f32.mrf.mxu0
        %v3026 = vadd.f32 %v2997, %v3025
        %3027 = vmatmul.bf16.gmra.mxu0 %v2449
        %v3028 = vpop.f32.mrf.mxu0
        %v3029 = vadd.f32 %v3000, %v3028
        %v3030 = vpop.f32.mrf.mxu0
        %v3031 = vadd.f32 %v3002, %v3030
        %3032 = vdwg.mxu0
        %3033 = vmatpush.bf16.msra.mxu0 %v2812
        %3034 = vmatpush.bf16.msra.mxu0 %v2811
        %3035 = vmatpush.bf16.msra.mxu0 %v2810
        %3036 = vmatpush.bf16.msra.mxu0 %v2809
        %3037 = vmatpush.bf16.msra.mxu0 %v2808
        %3038 = vmatpush.bf16.msra.mxu0 %v2807
        %3039 = vmatpush.bf16.msra.mxu0 %v2806
        %3040 = vmatpush.bf16.msra.mxu0 %v2805
        %3041 = vmatmul.bf16.gmra.mxu0 %v2429
        %v3042 = vpop.f32.mrf.mxu0
        %v3043 = vadd.f32 %v3014, %v3042
        %v3044 = vpop.f32.mrf.mxu0
        %v3045 = vadd.f32 %v3016, %v3044
        %3046 = vmatmul.bf16.gmra.mxu0 %v2436
        %v3047 = vpop.f32.mrf.mxu0
        %v3048 = vadd.f32 %v3019, %v3047
        %v3049 = vpop.f32.mrf.mxu0
        %v3050 = vadd.f32 %v3021, %v3049
        %3051 = vmatmul.bf16.gmra.mxu0 %v2443
        %v3052 = vpop.f32.mrf.mxu0
        %v3053 = vadd.f32 %v3024, %v3052
        %v3054 = vpop.f32.mrf.mxu0
        %v3055 = vadd.f32 %v3026, %v3054
        %3056 = vmatmul.bf16.gmra.mxu0 %v2450
        %v3057 = vpop.f32.mrf.mxu0
        %v3058 = vadd.f32 %v3029, %v3057
        %v3059 = vpop.f32.mrf.mxu0
        %v3060 = vadd.f32 %v3031, %v3059
        %3061 = vdwg.mxu0
        %3062 = vmatpush.bf16.msra.mxu0 %v2820
        %3063 = vmatpush.bf16.msra.mxu0 %v2819
        %3064 = vmatpush.bf16.msra.mxu0 %v2818
        %3065 = vmatpush.bf16.msra.mxu0 %v2817
        %3066 = vmatpush.bf16.msra.mxu0 %v2816
        %3067 = vmatpush.bf16.msra.mxu0 %v2815
        %3068 = vmatpush.bf16.msra.mxu0 %v2814
        %3069 = vmatpush.bf16.msra.mxu0 %v2813
        %3070 = vmatmul.bf16.gmra.mxu0 %v2430
        %v3071 = vpop.f32.mrf.mxu0
        %v3072 = vadd.f32 %v3043, %v3071
        %v3073 = vpop.f32.mrf.mxu0
        %v3074 = vadd.f32 %v3045, %v3073
        %3075 = vmatmul.bf16.gmra.mxu0 %v2437
        %v3076 = vpop.f32.mrf.mxu0
        %v3077 = vadd.f32 %v3048, %v3076
        %v3078 = vpop.f32.mrf.mxu0
        %v3079 = vadd.f32 %v3050, %v3078
        %3080 = vmatmul.bf16.gmra.mxu0 %v2444
        %v3081 = vpop.f32.mrf.mxu0
        %v3082 = vadd.f32 %v3053, %v3081
        %v3083 = vpop.f32.mrf.mxu0
        %v3084 = vadd.f32 %v3055, %v3083
        %3085 = vmatmul.bf16.gmra.mxu0 %v2451
        %v3086 = vpop.f32.mrf.mxu0
        %v3087 = vadd.f32 %v3058, %v3086
        %v3088 = vpop.f32.mrf.mxu0
        %v3089 = vadd.f32 %v3060, %v3088
        %3090 = vdwg.mxu0
        %3091 = vmatpush.bf16.msra.mxu0 %v2828
        %3092 = vmatpush.bf16.msra.mxu0 %v2827
        %3093 = vmatpush.bf16.msra.mxu0 %v2826
        %3094 = vmatpush.bf16.msra.mxu0 %v2825
        %3095 = vmatpush.bf16.msra.mxu0 %v2824
        %3096 = vmatpush.bf16.msra.mxu0 %v2823
        %3097 = vmatpush.bf16.msra.mxu0 %v2822
        %3098 = vmatpush.bf16.msra.mxu0 %v2821
        %3099 = vmatmul.bf16.gmra.mxu0 %v2431
        %v3100 = vpop.f32.mrf.mxu0
        %v3101 = vadd.f32 %v3072, %v3100
        %v3102 = vpop.f32.mrf.mxu0
        %v3103 = vadd.f32 %v3074, %v3102
        %3104 = vmatmul.bf16.gmra.mxu0 %v2438
        %v3105 = vpop.f32.mrf.mxu0
        %v3106 = vadd.f32 %v3077, %v3105
        %v3107 = vpop.f32.mrf.mxu0
        %v3108 = vadd.f32 %v3079, %v3107
        %3109 = vmatmul.bf16.gmra.mxu0 %v2445
        %v3110 = vpop.f32.mrf.mxu0
        %v3111 = vadd.f32 %v3082, %v3110
        %v3112 = vpop.f32.mrf.mxu0
        %v3113 = vadd.f32 %v3084, %v3112
        %3114 = vmatmul.bf16.gmra.mxu0 %v2452
        %v3115 = vpop.f32.mrf.mxu0
        %v3116 = vadd.f32 %v3087, %v3115
        %v3117 = vpop.f32.mrf.mxu0
        %v3118 = vadd.f32 %v3089, %v3117
        %3119 = vdwg.mxu0
        %3120 = vmatpush.bf16.msra.mxu0 %v2836
        %3121 = vmatpush.bf16.msra.mxu0 %v2835
        %3122 = vmatpush.bf16.msra.mxu0 %v2834
        %3123 = vmatpush.bf16.msra.mxu0 %v2833
        %3124 = vmatpush.bf16.msra.mxu0 %v2832
        %3125 = vmatpush.bf16.msra.mxu0 %v2831
        %3126 = vmatpush.bf16.msra.mxu0 %v2830
        %3127 = vmatpush.bf16.msra.mxu0 %v2829
        %3128 = vmatmul.bf16.gmra.mxu0 %v2432
        %v3129 = vpop.f32.mrf.mxu0
        %v3130 = vadd.f32 %v3101, %v3129
        %v3131 = vpop.f32.mrf.mxu0
        %v3132 = vadd.f32 %v3103, %v3131
        %3133 = vmatmul.bf16.gmra.mxu0 %v2439
        %v3134 = vpop.f32.mrf.mxu0
        %v3135 = vadd.f32 %v3106, %v3134
        %v3136 = vpop.f32.mrf.mxu0
        %v3137 = vadd.f32 %v3108, %v3136
        %3138 = vmatmul.bf16.gmra.mxu0 %v2446
        %v3139 = vpop.f32.mrf.mxu0
        %v3140 = vadd.f32 %v3111, %v3139
        %v3141 = vpop.f32.mrf.mxu0
        %v3142 = vadd.f32 %v3113, %v3141
        %3143 = vmatmul.bf16.gmra.mxu0 %v2453
        %v3144 = vpop.f32.mrf.mxu0
        %v3145 = vadd.f32 %v3116, %v3144
        %v3146 = vpop.f32.mrf.mxu0
        %v3147 = vadd.f32 %v3118, %v3146
        %3148 = vdwg.mxu0
        %3149 = vmatpush.bf16.msra.mxu0 %v2844
        %3150 = vmatpush.bf16.msra.mxu0 %v2843
        %3151 = vmatpush.bf16.msra.mxu0 %v2842
        %3152 = vmatpush.bf16.msra.mxu0 %v2841
        %3153 = vmatpush.bf16.msra.mxu0 %v2840
        %3154 = vmatpush.bf16.msra.mxu0 %v2839
        %3155 = vmatpush.bf16.msra.mxu0 %v2838
        %3156 = vmatpush.bf16.msra.mxu0 %v2837
        %3157 = vmatmul.bf16.gmra.mxu0 %v2433
        %v3158 = vpop.f32.mrf.mxu0
        %v3159 = vadd.f32 %v3130, %v3158
        %v3160 = vpop.f32.mrf.mxu0
        %v3161 = vadd.f32 %v3132, %v3160
        %3162 = vmatmul.bf16.gmra.mxu0 %v2440
        %v3163 = vpop.f32.mrf.mxu0
        %v3164 = vadd.f32 %v3135, %v3163
        %v3165 = vpop.f32.mrf.mxu0
        %v3166 = vadd.f32 %v3137, %v3165
        %3167 = vmatmul.bf16.gmra.mxu0 %v2447
        %v3168 = vpop.f32.mrf.mxu0
        %v3169 = vadd.f32 %v3140, %v3168
        %v3170 = vpop.f32.mrf.mxu0
        %v3171 = vadd.f32 %v3142, %v3170
        %3172 = vmatmul.bf16.gmra.mxu0 %v2454
        %v3173 = vpop.f32.mrf.mxu0
        %v3174 = vadd.f32 %v3145, %v3173
        %v3175 = vpop.f32.mrf.mxu0
        %v3176 = vadd.f32 %v3147, %v3175
        %3177 = vdwg.mxu0
        %v3178 = vld [vmem:[%s5] sm:$0x1]
        %v3180 = vperm.slane %v3178, 0
        %v3182 = vmul.f32 %v3159, %v3180
        %v3183 = vmul.f32 %v3161, %v3180
        %v3184 = vmul.f32 %v3164, %v3180
        %v3185 = vmul.f32 %v3166, %v3180
        %v3186 = vmul.f32 %v3169, %v3180
        %v3187 = vmul.f32 %v3171, %v3180
        %v3188 = vmul.f32 %v3174, %v3180
        %v3189 = vmul.f32 %v3176, %v3180
        %v3190 = vld [vmem:[%s6] sm:$0x1]
        %v3192 = vperm.slane %v3190, 0
        %v3194 = vadd.f32 %v3182, %v3192
        %v3195 = vadd.f32 %v3183, %v3192
        %v3196 = vadd.f32 %v3184, %v3192
        %v3197 = vadd.f32 %v3185, %v3192
        %v3198 = vadd.f32 %v3186, %v3192
        %v3199 = vadd.f32 %v3187, %v3192
        %v3200 = vadd.f32 %v3188, %v3192
        %v3201 = vadd.f32 %v3189, %v3192
        %v3202 = vmax.f32 %v3194, 0.0
        %v3203 = vmax.f32 %v3195, 0.0
        %v3204 = vmax.f32 %v3196, 0.0
        %v3205 = vmax.f32 %v3197, 0.0
        %v3206 = vmax.f32 %v3198, 0.0
        %v3207 = vmax.f32 %v3199, 0.0
        %v3208 = vmax.f32 %v3200, 0.0
        %v3209 = vmax.f32 %v3201, 0.0
        %3210 = vst [vmem:[%s302] sm:$0xff] %v3202
        %3211 = vst [vmem:[%s302 + $0x8] sm:$0xff] %v3203
        %3212 = vst [vmem:[%s302 + $0x10] sm:$0xff] %v3204
        %3213 = vst [vmem:[%s302 + $0x18] sm:$0xff] %v3205
        %3214 = vst [vmem:[%s302 + $0x20] sm:$0xff] %v3206
        %3215 = vst [vmem:[%s302 + $0x28] sm:$0xff] %v3207
        %3216 = vst [vmem:[%s302 + $0x30] sm:$0xff] %v3208
        %3217 = vst [vmem:[%s302 + $0x38] sm:$0xff] %v3209
        %s3218 = sand.u32 %s196, 1
        %s3219 = scalar_lea.sflag [#allocation6], %s3218
        %s3220 = sand.u32 %s196, 1
        %s3221 = smul.addr %s3220, 64
        %s3222 = scalar_lea.vmem [#allocation7], %s3221
        // Predicated region
        $region61: #{tpu_custom_call.1} parent=47 // pred_check
          %p3223 = pneg %p206
        $region62: #{tpu_custom_call.1} parent=47 // pred_check_branch
          %3225 = sbr.rel (%p3223) target = $region64
        $region63: #{tpu_custom_call.1} parent=47 // pred_region
          %s3226 = smul.u32 8, %s27
          %3228 = vsyncadd %s3219, 0
          %s3229 = smul.addr %s26, 8
          %s3230 = sadd.s32 %s3226, %s3229
          %s3231 = smul.addr %s3230, 8
          %s3232 = scalar_lea.hbm %s7, %s3231
          %s3233 = sshll.u32 %s3222, 4
          %s3234 = int_to_ptr.vmem [resolvable:$true] %s3233
          %s3235 = sshll.u32 %s3232, 4
          %s3236 = int_to_ptr.hbm [resolvable:$true] %s3235
          %3241 = dma.vmem_to_hbm [thread:$0]  %s3234, 1024, %s3236, %s3219, 128, 128, 8
        $region64: #{tpu_custom_call.1} parent=47 // pred_fallthru
          _
      $region48: #{tpu_custom_call.1} parent=5 // pred_fallthru
        _
      %p3242 = scmp.le.s32.totalorder 2, %s17
      // Predicated region
      $region65: #{tpu_custom_call.1} parent=5 // pred_check
        %p3243 = pneg %p3242
      $region66: #{tpu_custom_call.1} parent=5 // pred_check_branch
        %3245 = sbr.rel (%p3243) target = $region68
      $region67: #{tpu_custom_call.1} parent=5 // pred_region
        %s3246 = ssub.s32 %s17, 2
        // Predicated region
        $region69: #{tpu_custom_call.1} parent=67 // pred_check
          %p3247 = pneg %p212
        $region70: #{tpu_custom_call.1} parent=67 // pred_check_branch
          %3249 = sbr.rel (%p3247) target = $region72
        $region71: #{tpu_custom_call.1} parent=67 // pred_region
          %s3250 = sand.u32 %s197, 1
          %s3251 = scalar_lea.sflag [#allocation6], %s3250
          %s3252 = sand.u32 %s197, 1
          %s3253 = smul.addr %s3252, 64
          %s3254 = scalar_lea.vmem [#allocation7], %s3253
          %3256 = dma.done %s3251, 1024
        $region72: #{tpu_custom_call.1} parent=67 // pred_fallthru
          _
      $region68: #{tpu_custom_call.1} parent=5 // pred_fallthru
        _
    $region6: #{tpu_custom_call.1} parent=1 // loop_footer
      %s21 = sadd.s32 1, %s17
    $region7: #{tpu_custom_call.1} parent=1 // loop_footer_branch
      %16 = sbr.rel target = $region3
    $region8: #{tpu_custom_call.1} parent=1 // loop_exit
      _
    %3257 = vsyncpa [#allocation5], 1
    %s3258 = scalar_lea.sflag [#allocation5], 1
    %3259 = vsyncpa %s3258, 1
    %3260 = vsyncpa [#allocation6], 1
    %s3261 = scalar_lea.sflag [#allocation6], 1
    %3262 = vsyncpa %s3261, 1

</llo_original>
